<compile_context>
chip_gen: v7x
topology: tpu7x:2x2x1
jax: 0.10.0
libtpu: 0.0.40
codegen_flags: <defaults>
</compile_context>

<pallas_src>
import functools

import jax
import jax.numpy as jnp
from jax.experimental import pallas as pl
from jax.experimental.pallas import tpu as pltpu


def _round_up(n, m):
    return ((n + m - 1) // m) * m


def _residual_block_kernel(xc_ref, w1_ref, w2_ref, b1_ref, b2_ref, mask_ref,
                           out_ref, *, K, Wp, act_slope):
    # xc_ref  : (Cp, Ns)       x on this image's zero-padded spatial grid
    # w*_ref  : (K*K, Cp, Cp)  bf16 weights, w[t, co, ci], t = ky*K + kx
    # b*_ref  : (Cp, 1)        f32 biases
    # mask_ref: (1, Ns)        1.0 at interior spatial positions, 0.0 halo/pad
    # out_ref : (Cp, Ns)       output in the input dtype
    Cp, Ns = out_ref.shape
    P = K // 2

    # Static lane shifts for the K*K conv taps: tap[p] = src[p + off].
    shifts = []
    for ky in range(K):
        for kx in range(K):
            off = (ky - P) * Wp + (kx - P)
            shifts.append((-off) % Ns)

    def leaky(v):
        return jnp.maximum(v, act_slope * v)

    def conv(src_f32, w_ref):
        # 3x3 "same" conv as 9 accumulated (Cp,Cp)x(Cp,Ns) bf16 MXU dots with
        # an f32 accumulator (no concatenated patch tensor -> no vreg spills).
        acc = None
        for t, s in enumerate(shifts):
            tap = src_f32 if s == 0 else pltpu.roll(src_f32, s, 1)
            part = jnp.dot(w_ref[t], tap.astype(jnp.bfloat16),
                           preferred_element_type=jnp.float32)
            acc = part if acc is None else acc + part
        return acc

    xc = xc_ref[...].astype(jnp.float32)                       # (Cp, Ns)

    # conv1 + LeakyReLU; zero halo/pad lanes so conv2 sees exact "same" pad.
    act1 = leaky(conv(xc, w1_ref) + b1_ref[...]) * mask_ref[...]

    # conv2 + residual + LeakyReLU (halo/pad lanes are garbage -> discarded).
    y2 = conv(act1, w2_ref) + b2_ref[...]
    out_ref[...] = leaky(xc + y2).astype(out_ref.dtype)


def residual_block(x_nchw, w1_oihw, b1, w2_oihw, b2, act_slope=0.2):
    """Pallas ResidualBlock forward.  x_nchw: (B, C, H, W); weights OIHW."""
    B, C, H, W = x_nchw.shape
    K = w1_oihw.shape[2]
    P = K // 2
    Hp, Wp = H + 2 * P, W + 2 * P
    KK = K * K

    Cp = _round_up(max(C, 8), 8)          # channels -> sublane axis
    Ns = _round_up(Hp * Wp, 128)          # per-image lane-aligned spatial axis

    f32, bf16 = jnp.float32, jnp.bfloat16
    out_dtype = x_nchw.dtype

    # x -> (B, Cp, Ns): channels on sublanes, zero-padded spatial grid on lanes.
    x_nhwc = jnp.transpose(x_nchw, (0, 2, 3, 1))
    x_pad = jnp.pad(x_nhwc, ((0, 0), (P, P), (P, P), (0, Cp - C)))
    xc = jnp.transpose(x_pad, (0, 3, 1, 2)).reshape(B, Cp, Hp * Wp)
    xc = jnp.pad(xc, ((0, 0), (0, 0), (0, Ns - Hp * Wp)))

    # Weights OIHW -> (K*K, Cp_out, Cp_in) bf16 (MXU operands).
    def prep_w(w):
        wp = jnp.pad(w.astype(f32), ((0, Cp - C), (0, Cp - C), (0, 0), (0, 0)))
        return jnp.transpose(wp, (2, 3, 0, 1)).reshape(KK, Cp, Cp).astype(bf16)

    w1t, w2t = prep_w(w1_oihw), prep_w(w2_oihw)
    b1p = jnp.pad(b1.astype(f32), (0, Cp - C)).reshape(Cp, 1)
    b2p = jnp.pad(b2.astype(f32), (0, Cp - C)).reshape(Cp, 1)

    # Interior-position mask over one padded image grid (+ lane padding).
    hw = jnp.arange(Hp * Wp)
    hh, ww = hw // Wp, hw % Wp
    inter = ((hh >= P) & (hh < Hp - P) & (ww >= P) & (ww < Wp - P)).astype(f32)
    mask = jnp.pad(inter, (0, Ns - Hp * Wp)).reshape(1, Ns)

    kernel = functools.partial(_residual_block_kernel, K=K, Wp=Wp,
                               act_slope=act_slope)

    # Scoped-VMEM budget: double-buffered per-image blocks + params + slack.
    isz = jnp.dtype(out_dtype).itemsize
    est = 4 * (Cp * Ns * (4 + isz) + 2 * KK * Cp * Cp * 2 + 2 * Cp * 512 + Ns * 4)
    vmem_limit = int(min(64 * 1024 * 1024, max(32 * 1024 * 1024, est)))

    out_full = pl.pallas_call(
        kernel,
        out_shape=jax.ShapeDtypeStruct((B, Cp, Ns), out_dtype),
        grid_spec=pltpu.PrefetchScalarGridSpec(
            num_scalar_prefetch=0,
            grid=(B,),
            in_specs=[
                pl.BlockSpec((None, Cp, Ns), lambda b: (b, 0, 0)),   # xc
                pl.BlockSpec((KK, Cp, Cp), lambda b: (0, 0, 0)),     # w1
                pl.BlockSpec((KK, Cp, Cp), lambda b: (0, 0, 0)),     # w2
                pl.BlockSpec((Cp, 1), lambda b: (0, 0)),             # b1
                pl.BlockSpec((Cp, 1), lambda b: (0, 0)),             # b2
                pl.BlockSpec((1, Ns), lambda b: (0, 0)),             # mask
            ],
            out_specs=pl.BlockSpec((None, Cp, Ns), lambda b: (b, 0, 0)),
        ),
        compiler_params=pltpu.CompilerParams(
            dimension_semantics=("parallel",),
            vmem_limit_bytes=vmem_limit),
    )(xc, w1t, w2t, b1p, b2p, mask)

    # (B, Cp, Ns) -> (B, C, H, W): drop channel/lane padding, keep interior.
    out = out_full[:, :C, :Hp * Wp].reshape(B, C, Hp, Wp)[:, :, P:P + H,
                                                          P:P + W]
    return out


def _reference_forward(x, w1, b1, w2, b2, act_slope=0.2):
    """Pure-JAX reference (NCHW, OIHW) mirroring the PyTorch module."""
    def conv(v, w, b):
        y = jax.lax.conv_general_dilated(
            v, w, window_strides=(1, 1), padding="SAME",
            dimension_numbers=("NCHW", "OIHW", "NCHW"))
        return y + b.reshape(1, -1, 1, 1)

    def leaky(v):
        return jnp.where(v >= 0, v, act_slope * v)

    out = leaky(conv(x, w1, b1))
    out = conv(out, w2, b2)
    return leaky(x + out)


if __name__ == "__main__":
    B, C, H, W = 2, 4, 16, 16
    K = 3
    act_slope = 0.2

    key = jax.random.PRNGKey(0)
    kx, kw1, kb1, kw2, kb2 = jax.random.split(key, 5)

    # deterministic synthetic parameters (PyTorch-style uniform(-bound, bound))
    fan_in = C * K * K
    bound = 1.0 / (fan_in ** 0.5)
    x = jax.random.normal(kx, (B, C, H, W), dtype=jnp.float32)
    w1 = jax.random.uniform(kw1, (C, C, K, K), jnp.float32, -bound, bound)
    b1 = jax.random.uniform(kb1, (C,), jnp.float32, -bound, bound)
    w2 = jax.random.uniform(kw2, (C, C, K, K), jnp.float32, -bound, bound)
    b2 = jax.random.uniform(kb2, (C,), jnp.float32, -bound, bound)

    out = residual_block(x, w1, b1, w2, b2, act_slope=act_slope)
    out = jax.block_until_ready(out)

    ref = _reference_forward(x, w1, b1, w2, b2, act_slope=act_slope)
    assert out.shape == (B, C, H, W), out.shape
    # bf16 MXU operands (f32 accumulation) -> loosened tolerance vs f32 ref.
    assert jnp.allclose(out, ref, atol=3e-2, rtol=3e-2), \
        float(jnp.max(jnp.abs(out - ref)))

    print("KERNEL_OK")
</pallas_src>

<mosaic_0001>
module attributes {stable_mosaic.version = 11 : i64} {
  func.func @_residual_block_kernel(%arg0: i32, %arg1: memref<1x8x384xf32, #tpu.memory_space<vmem>>, %arg2: memref<9x8x8xbf16, #tpu.memory_space<vmem>>, %arg3: memref<9x8x8xbf16, #tpu.memory_space<vmem>>, %arg4: memref<8x1xf32, #tpu.memory_space<vmem>>, %arg5: memref<8x1xf32, #tpu.memory_space<vmem>>, %arg6: memref<1x384xf32, #tpu.memory_space<vmem>>, %arg7: memref<1x8x384xf32, #tpu.memory_space<vmem>>) attributes {dimension_semantics = [#tpu.dimension_semantics<parallel>], iteration_bounds = array<i64: 2>, scalar_prefetch = 0 : i64, scratch_operands = 0 : i64, tpu.core_type = #tpu.core_type<tc>, window_params = [{transform_indices = @transform_0, window_bounds = array<i64: 1, 8, 384>}, {pipeline_mode = #tpu.pipeline_mode<synchronous>, transform_indices = @transform_1, window_bounds = array<i64: 9, 8, 8>}, {pipeline_mode = #tpu.pipeline_mode<synchronous>, transform_indices = @transform_2, window_bounds = array<i64: 9, 8, 8>}, {pipeline_mode = #tpu.pipeline_mode<synchronous>, transform_indices = @transform_3, window_bounds = array<i64: 8, 1>}, {pipeline_mode = #tpu.pipeline_mode<synchronous>, transform_indices = @transform_4, window_bounds = array<i64: 8, 1>}, {pipeline_mode = #tpu.pipeline_mode<synchronous>, transform_indices = @transform_5, window_bounds = array<i64: 1, 384>}, {transform_indices = @transform_6, window_bounds = array<i64: 1, 8, 384>}]} {
    %c0 = arith.constant 0 : index
    %c0_0 = arith.constant 0 : index
    %c0_1 = arith.constant 0 : index
    %0 = vector.load %arg1[%c0, %c0_0, %c0_1] : memref<1x8x384xf32, #tpu.memory_space<vmem>>, vector<1x8x384xf32>
    %1 = vector.shape_cast %0 : vector<1x8x384xf32> to vector<8x384xf32>
    %c19_i32 = arith.constant 19 : i32
    %2 = tpu.dynamic_rotate %1 by %c19_i32 dim 1 : vector<8x384xf32>, i32 -> vector<8x384xf32>
    %c0_2 = arith.constant 0 : index
    %c0_3 = arith.constant 0 : index
    %c0_4 = arith.constant 0 : index
    %3 = vector.load %arg2[%c0_2, %c0_3, %c0_4] : memref<9x8x8xbf16, #tpu.memory_space<vmem>>, vector<1x8x8xbf16>
    %4 = vector.shape_cast %3 : vector<1x8x8xbf16> to vector<8x8xbf16>
    %5 = arith.truncf %2 : vector<8x384xf32> to vector<8x384xbf16>
    %cst = arith.constant dense<0.000000e+00> : vector<8x384xf32>
    %6 = tpu.matmul %4, %5, %cst {dimension_numbers = #tpu.dot_dimension_numbers<[1], [0], [0], [1], [0, 0, 1, 1], [], []>} : vector<8x8xbf16>, vector<8x384xbf16>, vector<8x384xf32> -> vector<8x384xf32>
    %c18_i32 = arith.constant 18 : i32
    %7 = tpu.dynamic_rotate %1 by %c18_i32 dim 1 : vector<8x384xf32>, i32 -> vector<8x384xf32>
    %c1 = arith.constant 1 : index
    %c0_5 = arith.constant 0 : index
    %c0_6 = arith.constant 0 : index
    %8 = vector.load %arg2[%c1, %c0_5, %c0_6] : memref<9x8x8xbf16, #tpu.memory_space<vmem>>, vector<1x8x8xbf16>
    %9 = vector.shape_cast %8 : vector<1x8x8xbf16> to vector<8x8xbf16>
    %10 = arith.truncf %7 : vector<8x384xf32> to vector<8x384xbf16>
    %cst_7 = arith.constant dense<0.000000e+00> : vector<8x384xf32>
    %11 = tpu.matmul %9, %10, %cst_7 {dimension_numbers = #tpu.dot_dimension_numbers<[1], [0], [0], [1], [0, 0, 1, 1], [], []>} : vector<8x8xbf16>, vector<8x384xbf16>, vector<8x384xf32> -> vector<8x384xf32>
    %12 = arith.addf %6, %11 : vector<8x384xf32>
    %c17_i32 = arith.constant 17 : i32
    %13 = tpu.dynamic_rotate %1 by %c17_i32 dim 1 : vector<8x384xf32>, i32 -> vector<8x384xf32>
    %c2 = arith.constant 2 : index
    %c0_8 = arith.constant 0 : index
    %c0_9 = arith.constant 0 : index
    %14 = vector.load %arg2[%c2, %c0_8, %c0_9] : memref<9x8x8xbf16, #tpu.memory_space<vmem>>, vector<1x8x8xbf16>
    %15 = vector.shape_cast %14 : vector<1x8x8xbf16> to vector<8x8xbf16>
    %16 = arith.truncf %13 : vector<8x384xf32> to vector<8x384xbf16>
    %cst_10 = arith.constant dense<0.000000e+00> : vector<8x384xf32>
    %17 = tpu.matmul %15, %16, %cst_10 {dimension_numbers = #tpu.dot_dimension_numbers<[1], [0], [0], [1], [0, 0, 1, 1], [], []>} : vector<8x8xbf16>, vector<8x384xbf16>, vector<8x384xf32> -> vector<8x384xf32>
    %18 = arith.addf %12, %17 : vector<8x384xf32>
    %c1_i32 = arith.constant 1 : i32
    %19 = tpu.dynamic_rotate %1 by %c1_i32 dim 1 : vector<8x384xf32>, i32 -> vector<8x384xf32>
    %c3 = arith.constant 3 : index
    %c0_11 = arith.constant 0 : index
    %c0_12 = arith.constant 0 : index
    %20 = vector.load %arg2[%c3, %c0_11, %c0_12] : memref<9x8x8xbf16, #tpu.memory_space<vmem>>, vector<1x8x8xbf16>
    %21 = vector.shape_cast %20 : vector<1x8x8xbf16> to vector<8x8xbf16>
    %22 = arith.truncf %19 : vector<8x384xf32> to vector<8x384xbf16>
    %cst_13 = arith.constant dense<0.000000e+00> : vector<8x384xf32>
    %23 = tpu.matmul %21, %22, %cst_13 {dimension_numbers = #tpu.dot_dimension_numbers<[1], [0], [0], [1], [0, 0, 1, 1], [], []>} : vector<8x8xbf16>, vector<8x384xbf16>, vector<8x384xf32> -> vector<8x384xf32>
    %24 = arith.addf %18, %23 : vector<8x384xf32>
    %c4 = arith.constant 4 : index
    %c0_14 = arith.constant 0 : index
    %c0_15 = arith.constant 0 : index
    %25 = vector.load %arg2[%c4, %c0_14, %c0_15] : memref<9x8x8xbf16, #tpu.memory_space<vmem>>, vector<1x8x8xbf16>
    %26 = vector.shape_cast %25 : vector<1x8x8xbf16> to vector<8x8xbf16>
    %27 = arith.truncf %1 : vector<8x384xf32> to vector<8x384xbf16>
    %cst_16 = arith.constant dense<0.000000e+00> : vector<8x384xf32>
    %28 = tpu.matmul %26, %27, %cst_16 {dimension_numbers = #tpu.dot_dimension_numbers<[1], [0], [0], [1], [0, 0, 1, 1], [], []>} : vector<8x8xbf16>, vector<8x384xbf16>, vector<8x384xf32> -> vector<8x384xf32>
    %29 = arith.addf %24, %28 : vector<8x384xf32>
    %c383_i32 = arith.constant 383 : i32
    %30 = tpu.dynamic_rotate %1 by %c383_i32 dim 1 : vector<8x384xf32>, i32 -> vector<8x384xf32>
    %c5 = arith.constant 5 : index
    %c0_17 = arith.constant 0 : index
    %c0_18 = arith.constant 0 : index
    %31 = vector.load %arg2[%c5, %c0_17, %c0_18] : memref<9x8x8xbf16, #tpu.memory_space<vmem>>, vector<1x8x8xbf16>
    %32 = vector.shape_cast %31 : vector<1x8x8xbf16> to vector<8x8xbf16>
    %33 = arith.truncf %30 : vector<8x384xf32> to vector<8x384xbf16>
    %cst_19 = arith.constant dense<0.000000e+00> : vector<8x384xf32>
    %34 = tpu.matmul %32, %33, %cst_19 {dimension_numbers = #tpu.dot_dimension_numbers<[1], [0], [0], [1], [0, 0, 1, 1], [], []>} : vector<8x8xbf16>, vector<8x384xbf16>, vector<8x384xf32> -> vector<8x384xf32>
    %35 = arith.addf %29, %34 : vector<8x384xf32>
    %c367_i32 = arith.constant 367 : i32
    %36 = tpu.dynamic_rotate %1 by %c367_i32 dim 1 : vector<8x384xf32>, i32 -> vector<8x384xf32>
    %c6 = arith.constant 6 : index
    %c0_20 = arith.constant 0 : index
    %c0_21 = arith.constant 0 : index
    %37 = vector.load %arg2[%c6, %c0_20, %c0_21] : memref<9x8x8xbf16, #tpu.memory_space<vmem>>, vector<1x8x8xbf16>
    %38 = vector.shape_cast %37 : vector<1x8x8xbf16> to vector<8x8xbf16>
    %39 = arith.truncf %36 : vector<8x384xf32> to vector<8x384xbf16>
    %cst_22 = arith.constant dense<0.000000e+00> : vector<8x384xf32>
    %40 = tpu.matmul %38, %39, %cst_22 {dimension_numbers = #tpu.dot_dimension_numbers<[1], [0], [0], [1], [0, 0, 1, 1], [], []>} : vector<8x8xbf16>, vector<8x384xbf16>, vector<8x384xf32> -> vector<8x384xf32>
    %41 = arith.addf %35, %40 : vector<8x384xf32>
    %c366_i32 = arith.constant 366 : i32
    %42 = tpu.dynamic_rotate %1 by %c366_i32 dim 1 : vector<8x384xf32>, i32 -> vector<8x384xf32>
    %c7 = arith.constant 7 : index
    %c0_23 = arith.constant 0 : index
    %c0_24 = arith.constant 0 : index
    %43 = vector.load %arg2[%c7, %c0_23, %c0_24] : memref<9x8x8xbf16, #tpu.memory_space<vmem>>, vector<1x8x8xbf16>
    %44 = vector.shape_cast %43 : vector<1x8x8xbf16> to vector<8x8xbf16>
    %45 = arith.truncf %42 : vector<8x384xf32> to vector<8x384xbf16>
    %cst_25 = arith.constant dense<0.000000e+00> : vector<8x384xf32>
    %46 = tpu.matmul %44, %45, %cst_25 {dimension_numbers = #tpu.dot_dimension_numbers<[1], [0], [0], [1], [0, 0, 1, 1], [], []>} : vector<8x8xbf16>, vector<8x384xbf16>, vector<8x384xf32> -> vector<8x384xf32>
    %47 = arith.addf %41, %46 : vector<8x384xf32>
    %c365_i32 = arith.constant 365 : i32
    %48 = tpu.dynamic_rotate %1 by %c365_i32 dim 1 : vector<8x384xf32>, i32 -> vector<8x384xf32>
    %c8 = arith.constant 8 : index
    %c0_26 = arith.constant 0 : index
    %c0_27 = arith.constant 0 : index
    %49 = vector.load %arg2[%c8, %c0_26, %c0_27] : memref<9x8x8xbf16, #tpu.memory_space<vmem>>, vector<1x8x8xbf16>
    %50 = vector.shape_cast %49 : vector<1x8x8xbf16> to vector<8x8xbf16>
    %51 = arith.truncf %48 : vector<8x384xf32> to vector<8x384xbf16>
    %cst_28 = arith.constant dense<0.000000e+00> : vector<8x384xf32>
    %52 = tpu.matmul %50, %51, %cst_28 {dimension_numbers = #tpu.dot_dimension_numbers<[1], [0], [0], [1], [0, 0, 1, 1], [], []>} : vector<8x8xbf16>, vector<8x384xbf16>, vector<8x384xf32> -> vector<8x384xf32>
    %53 = arith.addf %47, %52 : vector<8x384xf32>
    %c0_29 = arith.constant 0 : index
    %c0_30 = arith.constant 0 : index
    %54 = vector.load %arg4[%c0_29, %c0_30] : memref<8x1xf32, #tpu.memory_space<vmem>>, vector<8x1xf32>
    %55 = vector.broadcast %54 : vector<8x1xf32> to vector<8x384xf32>
    %56 = arith.addf %53, %55 : vector<8x384xf32>
    %cst_31 = arith.constant 2.000000e-01 : f32
    %57 = vector.broadcast %cst_31 : f32 to vector<8x384xf32>
    %58 = arith.mulf %57, %56 : vector<8x384xf32>
    %59 = arith.maximumf %56, %58 : vector<8x384xf32>
    %c0_32 = arith.constant 0 : index
    %c0_33 = arith.constant 0 : index
    %60 = vector.load %arg6[%c0_32, %c0_33] : memref<1x384xf32, #tpu.memory_space<vmem>>, vector<1x384xf32>
    %61 = vector.broadcast %60 : vector<1x384xf32> to vector<8x384xf32>
    %62 = arith.mulf %59, %61 : vector<8x384xf32>
    %c19_i32_34 = arith.constant 19 : i32
    %63 = tpu.dynamic_rotate %62 by %c19_i32_34 dim 1 : vector<8x384xf32>, i32 -> vector<8x384xf32>
    %c0_35 = arith.constant 0 : index
    %c0_36 = arith.constant 0 : index
    %c0_37 = arith.constant 0 : index
    %64 = vector.load %arg3[%c0_35, %c0_36, %c0_37] : memref<9x8x8xbf16, #tpu.memory_space<vmem>>, vector<1x8x8xbf16>
    %65 = vector.shape_cast %64 : vector<1x8x8xbf16> to vector<8x8xbf16>
    %66 = arith.truncf %63 : vector<8x384xf32> to vector<8x384xbf16>
    %cst_38 = arith.constant dense<0.000000e+00> : vector<8x384xf32>
    %67 = tpu.matmul %65, %66, %cst_38 {dimension_numbers = #tpu.dot_dimension_numbers<[1], [0], [0], [1], [0, 0, 1, 1], [], []>} : vector<8x8xbf16>, vector<8x384xbf16>, vector<8x384xf32> -> vector<8x384xf32>
    %c18_i32_39 = arith.constant 18 : i32
    %68 = tpu.dynamic_rotate %62 by %c18_i32_39 dim 1 : vector<8x384xf32>, i32 -> vector<8x384xf32>
    %c1_40 = arith.constant 1 : index
    %c0_41 = arith.constant 0 : index
    %c0_42 = arith.constant 0 : index
    %69 = vector.load %arg3[%c1_40, %c0_41, %c0_42] : memref<9x8x8xbf16, #tpu.memory_space<vmem>>, vector<1x8x8xbf16>
    %70 = vector.shape_cast %69 : vector<1x8x8xbf16> to vector<8x8xbf16>
    %71 = arith.truncf %68 : vector<8x384xf32> to vector<8x384xbf16>
    %cst_43 = arith.constant dense<0.000000e+00> : vector<8x384xf32>
    %72 = tpu.matmul %70, %71, %cst_43 {dimension_numbers = #tpu.dot_dimension_numbers<[1], [0], [0], [1], [0, 0, 1, 1], [], []>} : vector<8x8xbf16>, vector<8x384xbf16>, vector<8x384xf32> -> vector<8x384xf32>
    %73 = arith.addf %67, %72 : vector<8x384xf32>
    %c17_i32_44 = arith.constant 17 : i32
    %74 = tpu.dynamic_rotate %62 by %c17_i32_44 dim 1 : vector<8x384xf32>, i32 -> vector<8x384xf32>
    %c2_45 = arith.constant 2 : index
    %c0_46 = arith.constant 0 : index
    %c0_47 = arith.constant 0 : index
    %75 = vector.load %arg3[%c2_45, %c0_46, %c0_47] : memref<9x8x8xbf16, #tpu.memory_space<vmem>>, vector<1x8x8xbf16>
    %76 = vector.shape_cast %75 : vector<1x8x8xbf16> to vector<8x8xbf16>
    %77 = arith.truncf %74 : vector<8x384xf32> to vector<8x384xbf16>
    %cst_48 = arith.constant dense<0.000000e+00> : vector<8x384xf32>
    %78 = tpu.matmul %76, %77, %cst_48 {dimension_numbers = #tpu.dot_dimension_numbers<[1], [0], [0], [1], [0, 0, 1, 1], [], []>} : vector<8x8xbf16>, vector<8x384xbf16>, vector<8x384xf32> -> vector<8x384xf32>
    %79 = arith.addf %73, %78 : vector<8x384xf32>
    %c1_i32_49 = arith.constant 1 : i32
    %80 = tpu.dynamic_rotate %62 by %c1_i32_49 dim 1 : vector<8x384xf32>, i32 -> vector<8x384xf32>
    %c3_50 = arith.constant 3 : index
    %c0_51 = arith.constant 0 : index
    %c0_52 = arith.constant 0 : index
    %81 = vector.load %arg3[%c3_50, %c0_51, %c0_52] : memref<9x8x8xbf16, #tpu.memory_space<vmem>>, vector<1x8x8xbf16>
    %82 = vector.shape_cast %81 : vector<1x8x8xbf16> to vector<8x8xbf16>
    %83 = arith.truncf %80 : vector<8x384xf32> to vector<8x384xbf16>
    %cst_53 = arith.constant dense<0.000000e+00> : vector<8x384xf32>
    %84 = tpu.matmul %82, %83, %cst_53 {dimension_numbers = #tpu.dot_dimension_numbers<[1], [0], [0], [1], [0, 0, 1, 1], [], []>} : vector<8x8xbf16>, vector<8x384xbf16>, vector<8x384xf32> -> vector<8x384xf32>
    %85 = arith.addf %79, %84 : vector<8x384xf32>
    %c4_54 = arith.constant 4 : index
    %c0_55 = arith.constant 0 : index
    %c0_56 = arith.constant 0 : index
    %86 = vector.load %arg3[%c4_54, %c0_55, %c0_56] : memref<9x8x8xbf16, #tpu.memory_space<vmem>>, vector<1x8x8xbf16>
    %87 = vector.shape_cast %86 : vector<1x8x8xbf16> to vector<8x8xbf16>
    %88 = arith.truncf %62 : vector<8x384xf32> to vector<8x384xbf16>
    %cst_57 = arith.constant dense<0.000000e+00> : vector<8x384xf32>
    %89 = tpu.matmul %87, %88, %cst_57 {dimension_numbers = #tpu.dot_dimension_numbers<[1], [0], [0], [1], [0, 0, 1, 1], [], []>} : vector<8x8xbf16>, vector<8x384xbf16>, vector<8x384xf32> -> vector<8x384xf32>
    %90 = arith.addf %85, %89 : vector<8x384xf32>
    %c383_i32_58 = arith.constant 383 : i32
    %91 = tpu.dynamic_rotate %62 by %c383_i32_58 dim 1 : vector<8x384xf32>, i32 -> vector<8x384xf32>
    %c5_59 = arith.constant 5 : index
    %c0_60 = arith.constant 0 : index
    %c0_61 = arith.constant 0 : index
    %92 = vector.load %arg3[%c5_59, %c0_60, %c0_61] : memref<9x8x8xbf16, #tpu.memory_space<vmem>>, vector<1x8x8xbf16>
    %93 = vector.shape_cast %92 : vector<1x8x8xbf16> to vector<8x8xbf16>
    %94 = arith.truncf %91 : vector<8x384xf32> to vector<8x384xbf16>
    %cst_62 = arith.constant dense<0.000000e+00> : vector<8x384xf32>
    %95 = tpu.matmul %93, %94, %cst_62 {dimension_numbers = #tpu.dot_dimension_numbers<[1], [0], [0], [1], [0, 0, 1, 1], [], []>} : vector<8x8xbf16>, vector<8x384xbf16>, vector<8x384xf32> -> vector<8x384xf32>
    %96 = arith.addf %90, %95 : vector<8x384xf32>
    %c367_i32_63 = arith.constant 367 : i32
    %97 = tpu.dynamic_rotate %62 by %c367_i32_63 dim 1 : vector<8x384xf32>, i32 -> vector<8x384xf32>
    %c6_64 = arith.constant 6 : index
    %c0_65 = arith.constant 0 : index
    %c0_66 = arith.constant 0 : index
    %98 = vector.load %arg3[%c6_64, %c0_65, %c0_66] : memref<9x8x8xbf16, #tpu.memory_space<vmem>>, vector<1x8x8xbf16>
    %99 = vector.shape_cast %98 : vector<1x8x8xbf16> to vector<8x8xbf16>
    %100 = arith.truncf %97 : vector<8x384xf32> to vector<8x384xbf16>
    %cst_67 = arith.constant dense<0.000000e+00> : vector<8x384xf32>
    %101 = tpu.matmul %99, %100, %cst_67 {dimension_numbers = #tpu.dot_dimension_numbers<[1], [0], [0], [1], [0, 0, 1, 1], [], []>} : vector<8x8xbf16>, vector<8x384xbf16>, vector<8x384xf32> -> vector<8x384xf32>
    %102 = arith.addf %96, %101 : vector<8x384xf32>
    %c366_i32_68 = arith.constant 366 : i32
    %103 = tpu.dynamic_rotate %62 by %c366_i32_68 dim 1 : vector<8x384xf32>, i32 -> vector<8x384xf32>
    %c7_69 = arith.constant 7 : index
    %c0_70 = arith.constant 0 : index
    %c0_71 = arith.constant 0 : index
    %104 = vector.load %arg3[%c7_69, %c0_70, %c0_71] : memref<9x8x8xbf16, #tpu.memory_space<vmem>>, vector<1x8x8xbf16>
    %105 = vector.shape_cast %104 : vector<1x8x8xbf16> to vector<8x8xbf16>
    %106 = arith.truncf %103 : vector<8x384xf32> to vector<8x384xbf16>
    %cst_72 = arith.constant dense<0.000000e+00> : vector<8x384xf32>
    %107 = tpu.matmul %105, %106, %cst_72 {dimension_numbers = #tpu.dot_dimension_numbers<[1], [0], [0], [1], [0, 0, 1, 1], [], []>} : vector<8x8xbf16>, vector<8x384xbf16>, vector<8x384xf32> -> vector<8x384xf32>
    %108 = arith.addf %102, %107 : vector<8x384xf32>
    %c365_i32_73 = arith.constant 365 : i32
    %109 = tpu.dynamic_rotate %62 by %c365_i32_73 dim 1 : vector<8x384xf32>, i32 -> vector<8x384xf32>
    %c8_74 = arith.constant 8 : index
    %c0_75 = arith.constant 0 : index
    %c0_76 = arith.constant 0 : index
    %110 = vector.load %arg3[%c8_74, %c0_75, %c0_76] : memref<9x8x8xbf16, #tpu.memory_space<vmem>>, vector<1x8x8xbf16>
    %111 = vector.shape_cast %110 : vector<1x8x8xbf16> to vector<8x8xbf16>
    %112 = arith.truncf %109 : vector<8x384xf32> to vector<8x384xbf16>
    %cst_77 = arith.constant dense<0.000000e+00> : vector<8x384xf32>
    %113 = tpu.matmul %111, %112, %cst_77 {dimension_numbers = #tpu.dot_dimension_numbers<[1], [0], [0], [1], [0, 0, 1, 1], [], []>} : vector<8x8xbf16>, vector<8x384xbf16>, vector<8x384xf32> -> vector<8x384xf32>
    %114 = arith.addf %108, %113 : vector<8x384xf32>
    %c0_78 = arith.constant 0 : index
    %c0_79 = arith.constant 0 : index
    %115 = vector.load %arg5[%c0_78, %c0_79] : memref<8x1xf32, #tpu.memory_space<vmem>>, vector<8x1xf32>
    %116 = vector.broadcast %115 : vector<8x1xf32> to vector<8x384xf32>
    %117 = arith.addf %114, %116 : vector<8x384xf32>
    %118 = arith.addf %1, %117 : vector<8x384xf32>
    %cst_80 = arith.constant 2.000000e-01 : f32
    %119 = vector.broadcast %cst_80 : f32 to vector<8x384xf32>
    %120 = arith.mulf %119, %118 : vector<8x384xf32>
    %121 = arith.maximumf %118, %120 : vector<8x384xf32>
    %c0_81 = arith.constant 0 : index
    %c0_82 = arith.constant 0 : index
    %c0_83 = arith.constant 0 : index
    %122 = vector.load %arg7[%c0_81, %c0_82, %c0_83] : memref<1x8x384xf32, #tpu.memory_space<vmem>>, vector<1x8x384xf32>
    %123 = vector.shape_cast %122 : vector<1x8x384xf32> to vector<8x384xf32>
    %124 = vector.shape_cast %121 : vector<8x384xf32> to vector<1x8x384xf32>
    tpu.vector_store %arg7[%c0_81, %c0_82, %c0_83], %124 {strides = array<i32>} : memref<1x8x384xf32, #tpu.memory_space<vmem>>, vector<1x8x384xf32>,
    return
  }
  func.func @transform_0(%arg0: i32) -> (i32, i32, i32) {
    %c0_i32 = arith.constant 0 : i32
    %c0_i32_0 = arith.constant 0 : i32
    %c0_i32_1 = arith.constant 0 : i32
    return %arg0, %c0_i32, %c0_i32_0 : i32, i32, i32
  }
  func.func @transform_1(%arg0: i32) -> (i32, i32, i32) {
    %c0_i32 = arith.constant 0 : i32
    %c0_i32_0 = arith.constant 0 : i32
    %c0_i32_1 = arith.constant 0 : i32
    %c0_i32_2 = arith.constant 0 : i32
    return %c0_i32, %c0_i32_0, %c0_i32_1 : i32, i32, i32
  }
  func.func @transform_2(%arg0: i32) -> (i32, i32, i32) {
    %c0_i32 = arith.constant 0 : i32
    %c0_i32_0 = arith.constant 0 : i32
    %c0_i32_1 = arith.constant 0 : i32
    %c0_i32_2 = arith.constant 0 : i32
    return %c0_i32, %c0_i32_0, %c0_i32_1 : i32, i32, i32
  }
  func.func @transform_3(%arg0: i32) -> (i32, i32) {
    %c0_i32 = arith.constant 0 : i32
    %c0_i32_0 = arith.constant 0 : i32
    %c0_i32_1 = arith.constant 0 : i32
    return %c0_i32, %c0_i32_0 : i32, i32
  }
  func.func @transform_4(%arg0: i32) -> (i32, i32) {
    %c0_i32 = arith.constant 0 : i32
    %c0_i32_0 = arith.constant 0 : i32
    %c0_i32_1 = arith.constant 0 : i32
    return %c0_i32, %c0_i32_0 : i32, i32
  }
  func.func @transform_5(%arg0: i32) -> (i32, i32) {
    %c0_i32 = arith.constant 0 : i32
    %c0_i32_0 = arith.constant 0 : i32
    %c0_i32_1 = arith.constant 0 : i32
    return %c0_i32, %c0_i32_0 : i32, i32
  }
  func.func @transform_6(%arg0: i32) -> (i32, i32, i32) {
    %c0_i32 = arith.constant 0 : i32
    %c0_i32_0 = arith.constant 0 : i32
    %c0_i32_1 = arith.constant 0 : i32
    return %arg0, %c0_i32, %c0_i32_0 : i32, i32, i32
  }
}

</mosaic_0001>

<llo_original>
// kernel: tpu_custom_call.1
$region0: #{tpu_custom_call.1}
  #allocation0 [shape = 'u32[]', space=smem, size = 0x4, offset = 0x4, fixed_abs, tag = 'smem constant byte address 0x4 - core index']
  #allocation1 [shape = 'u32[144,128]{1,0:T(1,128)}', space=vmem, size = 0x12000, scoped, tag = 'internal scratch']
  %s0 = inlined_call_operand.vmem [shape: f32[2,8,384], index: 0, kind: input, shape index: {}]
  %s1 = inlined_call_operand.vmem [shape: bf16[9,8,8], index: 1, kind: input, shape index: {}]
  %s2 = inlined_call_operand.vmem [shape: bf16[9,8,8], index: 2, kind: input, shape index: {}]
  %s3 = inlined_call_operand.vmem [shape: f32[8,1], index: 3, kind: input, shape index: {}]
  %s4 = inlined_call_operand.vmem [shape: f32[8,1], index: 4, kind: input, shape index: {}]
  %s5 = inlined_call_operand.vmem [shape: f32[1,384], index: 5, kind: input, shape index: {}]
  %s6 = inlined_call_operand.hbm [shape: f32[2,8,384], index: 6, kind: output, shape index: {}]
  %s7 = sld [smem:[#allocation0]]
  $region57: #{tpu_custom_call.1} parent=0
    _
  %s9 = ssub.s32 1, %s7
  %s10 = scalar_select 0, %s9, %s7
  $region1: #{tpu_custom_call.1} parent=0
    #allocation2 [shape = 'u8[24576]{0}', space=vmem, size = 0x6000, scoped, tag = 'output window, operand 0']
    #allocation3 [shape = 's32[2]{0}', space=sflag, size = 0x8, scoped, tag = 'scoped memory for tpu_custom_call.1']
    %11 = vsyncpa [#allocation3], 0
    %s12 = scalar_lea.sflag [#allocation3], 1
    %13 = vsyncpa %s12, 0
    loop: start=0, step=1, limit=4
    $region2: #{tpu_custom_call.1} parent=1 // loop_pre_header
      _
    $region3: #{tpu_custom_call.1} parent=1 // loop_header
      %s15 = sphi 0, %s19
      %p16 = scmp.ge.s32.totalorder %s15, 4
      %s25 = sphi 0, %s27
      %s28 = sphi 0, %s25
      %s29 = sphi 0, %s28
      %s45 = sphi 0, %s29
      %s49 = sphi 0, %s49
      %s51 = sphi 0, %s49
      %s52 = sphi 0, %s51
      %s66 = sphi 0, %s52
      %s70 = sphi 0, %s70
      %s72 = sphi 0, %s70
      %s73 = sphi 0, %s72
      %s87 = sphi 0, %s73
      %s91 = sphi 0, %s91
      %s93 = sphi 0, %s91
      %s94 = sphi 0, %s93
      %s108 = sphi 0, %s94
      %s112 = sphi 0, %s112
      %s114 = sphi 0, %s112
      %s115 = sphi 0, %s114
      %s129 = sphi 0, %s115
      %s133 = sphi 0, %s133
      %s135 = sphi 0, %s133
      %s136 = sphi 0, %s135
      %s150 = sphi 0, %s136
      %s156 = sphi 0, %s158
      %s159 = sphi 0, %s156
      %s160 = sphi 0, %s159
      %s176 = sphi 0, %s160
    $region4: #{tpu_custom_call.1} parent=1 // loop_header_branch
      %18 = sbr.rel (%p16) target = $region8
    $region5: #{tpu_custom_call.1} parent=1 // loop_body
      %s20 = ssub.s32 %s15, 1
      %s21 = ssub.s32 %s15, 2
      %s22 = sadd.s32 %s15, 1
      %s23 = ssub.s32 %s15, %s22
      %p24 = scmp.eq.s32.totalorder %s23, 0
      %s26 = sadd.s32 %s25, 1
      %s27 = scalar_select %p24, %s25, %s26
      %p30 = pneg %p24
      %p31 = scmp.eq.s32.totalorder %s15, 1
      %p32 = por %p30, %p31
      %p33 = scmp.ne.s32.totalorder %s25, %s28
      %p34 = scmp.eq.s32.totalorder %s15, 0
      %p35 = por %p33, %p34
      %p36 = scmp.ne.s32.totalorder %s25, %s28
      %p37 = scmp.eq.s32.totalorder %s20, 1
      %p38 = por %p36, %p37
      %p39 = scmp.ne.s32.totalorder %s28, %s29
      %p40 = scmp.eq.s32.totalorder %s20, 0
      %p41 = por %p39, %p40
      %p42 = scmp.ne.s32.totalorder %s28, %s29
      %p43 = scmp.eq.s32.totalorder %s21, 1
      %p44 = por %p42, %p43
      %p46 = scmp.ne.s32.totalorder %s29, %s45
      %p47 = scmp.eq.s32.totalorder %s21, 0
      %p48 = por %p46, %p47
      %s50 = sadd.s32 %s49, 1
      %p53 = scmp.eq.s32.totalorder %s15, 1
      %p54 = scmp.ne.s32.totalorder %s49, %s51
      %p55 = scmp.eq.s32.totalorder %s15, 0
      %p56 = por %p54, %p55
      %p57 = scmp.ne.s32.totalorder %s49, %s51
      %p58 = scmp.eq.s32.totalorder %s20, 1
      %p59 = por %p57, %p58
      %p60 = scmp.ne.s32.totalorder %s51, %s52
      %p61 = scmp.eq.s32.totalorder %s20, 0
      %p62 = por %p60, %p61
      %p63 = scmp.ne.s32.totalorder %s51, %s52
      %p64 = scmp.eq.s32.totalorder %s21, 1
      %p65 = por %p63, %p64
      %p67 = scmp.ne.s32.totalorder %s52, %s66
      %p68 = scmp.eq.s32.totalorder %s21, 0
      %p69 = por %p67, %p68
      %s71 = sadd.s32 %s70, 1
      %p74 = scmp.eq.s32.totalorder %s15, 1
      %p75 = scmp.ne.s32.totalorder %s70, %s72
      %p76 = scmp.eq.s32.totalorder %s15, 0
      %p77 = por %p75, %p76
      %p78 = scmp.ne.s32.totalorder %s70, %s72
      %p79 = scmp.eq.s32.totalorder %s20, 1
      %p80 = por %p78, %p79
      %p81 = scmp.ne.s32.totalorder %s72, %s73
      %p82 = scmp.eq.s32.totalorder %s20, 0
      %p83 = por %p81, %p82
      %p84 = scmp.ne.s32.totalorder %s72, %s73
      %p85 = scmp.eq.s32.totalorder %s21, 1
      %p86 = por %p84, %p85
      %p88 = scmp.ne.s32.totalorder %s73, %s87
      %p89 = scmp.eq.s32.totalorder %s21, 0
      %p90 = por %p88, %p89
      %s92 = sadd.s32 %s91, 1
      %p95 = scmp.eq.s32.totalorder %s15, 1
      %p96 = scmp.ne.s32.totalorder %s91, %s93
      %p97 = scmp.eq.s32.totalorder %s15, 0
      %p98 = por %p96, %p97
      %p99 = scmp.ne.s32.totalorder %s91, %s93
      %p100 = scmp.eq.s32.totalorder %s20, 1
      %p101 = por %p99, %p100
      %p102 = scmp.ne.s32.totalorder %s93, %s94
      %p103 = scmp.eq.s32.totalorder %s20, 0
      %p104 = por %p102, %p103
      %p105 = scmp.ne.s32.totalorder %s93, %s94
      %p106 = scmp.eq.s32.totalorder %s21, 1
      %p107 = por %p105, %p106
      %p109 = scmp.ne.s32.totalorder %s94, %s108
      %p110 = scmp.eq.s32.totalorder %s21, 0
      %p111 = por %p109, %p110
      %s113 = sadd.s32 %s112, 1
      %p116 = scmp.eq.s32.totalorder %s15, 1
      %p117 = scmp.ne.s32.totalorder %s112, %s114
      %p118 = scmp.eq.s32.totalorder %s15, 0
      %p119 = por %p117, %p118
      %p120 = scmp.ne.s32.totalorder %s112, %s114
      %p121 = scmp.eq.s32.totalorder %s20, 1
      %p122 = por %p120, %p121
      %p123 = scmp.ne.s32.totalorder %s114, %s115
      %p124 = scmp.eq.s32.totalorder %s20, 0
      %p125 = por %p123, %p124
      %p126 = scmp.ne.s32.totalorder %s114, %s115
      %p127 = scmp.eq.s32.totalorder %s21, 1
      %p128 = por %p126, %p127
      %p130 = scmp.ne.s32.totalorder %s115, %s129
      %p131 = scmp.eq.s32.totalorder %s21, 0
      %p132 = por %p130, %p131
      %s134 = sadd.s32 %s133, 1
      %p137 = scmp.eq.s32.totalorder %s15, 1
      %p138 = scmp.ne.s32.totalorder %s133, %s135
      %p139 = scmp.eq.s32.totalorder %s15, 0
      %p140 = por %p138, %p139
      %p141 = scmp.ne.s32.totalorder %s133, %s135
      %p142 = scmp.eq.s32.totalorder %s20, 1
      %p143 = por %p141, %p142
      %p144 = scmp.ne.s32.totalorder %s135, %s136
      %p145 = scmp.eq.s32.totalorder %s20, 0
      %p146 = por %p144, %p145
      %p147 = scmp.ne.s32.totalorder %s135, %s136
      %p148 = scmp.eq.s32.totalorder %s21, 1
      %p149 = por %p147, %p148
      %p151 = scmp.ne.s32.totalorder %s136, %s150
      %p152 = scmp.eq.s32.totalorder %s21, 0
      %p153 = por %p151, %p152
      %s154 = ssub.s32 %s15, %s22
      %p155 = scmp.eq.s32.totalorder %s154, 0
      %s157 = sadd.s32 %s156, 1
      %s158 = scalar_select %p155, %s156, %s157
      %p161 = pneg %p155
      %p162 = scmp.eq.s32.totalorder %s15, 1
      %p163 = por %p161, %p162
      %p164 = scmp.ne.s32.totalorder %s156, %s159
      %p165 = scmp.eq.s32.totalorder %s15, 0
      %p166 = por %p164, %p165
      %p167 = scmp.ne.s32.totalorder %s156, %s159
      %p168 = scmp.eq.s32.totalorder %s20, 1
      %p169 = por %p167, %p168
      %p170 = scmp.ne.s32.totalorder %s159, %s160
      %p171 = scmp.eq.s32.totalorder %s20, 0
      %p172 = por %p170, %p171
      %p173 = scmp.ne.s32.totalorder %s159, %s160
      %p174 = scmp.eq.s32.totalorder %s21, 1
      %p175 = por %p173, %p174
      %p177 = scmp.ne.s32.totalorder %s160, %s176
      %p178 = scmp.eq.s32.totalorder %s21, 0
      %p179 = por %p177, %p178
      %p180 = scmp.le.s32.totalorder 1, %s15
      %p181 = scmp.lt.s32.totalorder %s15, 3
      %p182 = pnand %p180, %p181
      %p183 = pneg %p182
      // Predicated region
      $region9: #{tpu_custom_call.1} parent=5 // pred_check
        _
      $region10: #{tpu_custom_call.1} parent=5 // pred_check_branch
        %185 = sbr.rel (%p182) target = $region12
      $region11: #{tpu_custom_call.1} parent=5 // pred_region
        %s186 = ssub.s32 %s15, 1
        // Predicated region
        $region13: #{tpu_custom_call.1} parent=11 // pred_check
          %p187 = pneg %p62
        $region14: #{tpu_custom_call.1} parent=11 // pred_check_branch
          %189 = sbr.rel (%p187) target = $region16
        $region15: #{tpu_custom_call.1} parent=11 // pred_region
          _
        $region16: #{tpu_custom_call.1} parent=11 // pred_fallthru
          _
        // Predicated region
        $region17: #{tpu_custom_call.1} parent=11 // pred_check
          %p190 = pneg %p83
        $region18: #{tpu_custom_call.1} parent=11 // pred_check_branch
          %192 = sbr.rel (%p190) target = $region20
        $region19: #{tpu_custom_call.1} parent=11 // pred_region
          _
        $region20: #{tpu_custom_call.1} parent=11 // pred_fallthru
          _
        // Predicated region
        $region21: #{tpu_custom_call.1} parent=11 // pred_check
          %p193 = pneg %p104
        $region22: #{tpu_custom_call.1} parent=11 // pred_check_branch
          %195 = sbr.rel (%p193) target = $region24
        $region23: #{tpu_custom_call.1} parent=11 // pred_region
          _
        $region24: #{tpu_custom_call.1} parent=11 // pred_fallthru
          _
        // Predicated region
        $region25: #{tpu_custom_call.1} parent=11 // pred_check
          %p196 = pneg %p125
        $region26: #{tpu_custom_call.1} parent=11 // pred_check_branch
          %198 = sbr.rel (%p196) target = $region28
        $region27: #{tpu_custom_call.1} parent=11 // pred_region
          _
        $region28: #{tpu_custom_call.1} parent=11 // pred_fallthru
          _
        // Predicated region
        $region29: #{tpu_custom_call.1} parent=11 // pred_check
          %p199 = pneg %p146
        $region30: #{tpu_custom_call.1} parent=11 // pred_check_branch
          %201 = sbr.rel (%p199) target = $region32
        $region31: #{tpu_custom_call.1} parent=11 // pred_region
          _
        $region32: #{tpu_custom_call.1} parent=11 // pred_fallthru
          _
      $region12: #{tpu_custom_call.1} parent=5 // pred_fallthru
        _
      %p202 = scmp.lt.s32.totalorder %s15, 2
      // Predicated region
      $region33: #{tpu_custom_call.1} parent=5 // pred_check
        %p203 = pneg %p202
      $region34: #{tpu_custom_call.1} parent=5 // pred_check_branch
        %205 = sbr.rel (%p203) target = $region36
      $region35: #{tpu_custom_call.1} parent=5 // pred_region
        // Predicated region
        $region37: #{tpu_custom_call.1} parent=35 // pred_check
          %p206 = pneg %p35
        $region38: #{tpu_custom_call.1} parent=35 // pred_check_branch
          %208 = sbr.rel (%p206) target = $region40
        $region39: #{tpu_custom_call.1} parent=35 // pred_region
          %p209 = scmp.lt.s32.totalorder %s15, 1
          %s210 = scalar_select %p209, %s15, 1
          %s211 = smul.addr %s210, 3
          %s212 = smul.addr %s211, 8
          %s213 = scalar_lea.vmem %s0, %s212
        $region40: #{tpu_custom_call.1} parent=35 // pred_fallthru
          _
      $region36: #{tpu_custom_call.1} parent=5 // pred_fallthru
        _
      %p214 = scmp.le.s32.totalorder 1, %s15
      %p215 = scmp.lt.s32.totalorder %s15, 3
      %p216 = pnand %p214, %p215
      %p217 = pneg %p216
      // Predicated region
      $region41: #{tpu_custom_call.1} parent=5 // pred_check
        _
      $region42: #{tpu_custom_call.1} parent=5 // pred_check_branch
        %219 = sbr.rel (%p216) target = $region44
      $region43: #{tpu_custom_call.1} parent=5 // pred_region
        %s220 = ssub.s32 %s15, 1
        %p221 = scmp.lt.s32.totalorder %s20, 1
        %s222 = scalar_select %p221, %s20, 1
        %s223 = smul.addr %s222, 3
        %s224 = smul.addr %s223, 8
        %s225 = scalar_lea.vmem %s0, %s224
        %p226 = pneg %p41
        %p227 = pneg %p38
        %p228 = pneg %p62
        %p229 = pneg %p59
        %p230 = pneg %p83
        %p231 = pneg %p80
        %p232 = pneg %p104
        %p233 = pneg %p101
        %p234 = pneg %p125
        %p235 = pneg %p122
        %p236 = pneg %p146
        %p237 = pneg %p143
        %p238 = pneg %p172
        %p239 = pneg %p169
        %s240 = sand.u32 %s159, 1
        %s241 = scalar_lea.sflag [#allocation3], %s240
        %s242 = sand.u32 %s159, 1
        %s243 = smul.addr %s242, 24
        %s244 = scalar_lea.vmem [#allocation2], %s243
        %p245 = scmp.lt.s32.totalorder %s20, 1
        %s246 = scalar_select %p245, %s20, 1
        %s247 = smul.addr %s246, 3
        %s248 = smul.addr %s247, 8
        %s249 = scalar_lea.vmem %s0, %s248
        %v251 = vld [vmem:[%s249] sm:$0xff]
        %v252 = vld [vmem:[%s249 + $0x8] sm:$0xff]
        %v253 = vld [vmem:[%s249 + $0x10] sm:$0xff]
        %254 = vrot.lane.b32.xlu0 %v251, 19
        %v255 = vpop.permute.xlu0 %254
        %256 = vrot.lane.b32.xlu0 %v252, 19
        %v257 = vpop.permute.xlu0 %256
        %258 = vrot.lane.b32.xlu0 %v253, 19
        %v259 = vpop.permute.xlu0 %258
        %v260 = vlaneseq
        %v261 = vand.u32 %v260, 127
        %vm262 = vcmp.lt.s32.totalorder %v261, 19
        %v263 = vsel %vm262, %v257, %v259
        %v264 = vsel %vm262, %v255, %v257
        %v265 = vsel %vm262, %v259, %v255
        %v266 = vld [vmem:[%s1] sm:$0xf]
        %v267 = vpack.c.bf16 %v265, %v265
        %v268 = vpack.c.bf16 %v264, %v264
        %v269 = vpack.c.bf16 %v263, %v263
        %270 = vrot.lane.b32.xlu0 %v251, 18
        %v271 = vpop.permute.xlu0 %270
        %272 = vrot.lane.b32.xlu0 %v252, 18
        %v273 = vpop.permute.xlu0 %272
        %274 = vrot.lane.b32.xlu0 %v253, 18
        %v275 = vpop.permute.xlu0 %274
        %vm276 = vcmp.lt.s32.totalorder %v261, 18
        %v277 = vsel %vm276, %v273, %v275
        %v278 = vsel %vm276, %v271, %v273
        %v279 = vsel %vm276, %v275, %v271
        %s280 = scalar_lea.vmem %s1, 4
        %v281 = vld [vmem:[%s280] sm:$0xf]
        %v282 = vpack.c.bf16 %v279, %v279
        %v283 = vpack.c.bf16 %v278, %v278
        %v284 = vpack.c.bf16 %v277, %v277
        %vm285 = vcmask 64512
        %v287 = vsel %vm285, %v281, 0
        %vm289 = vcmask 1043456
        %v291 = vsel %vm289, %v282, 0
        %v294 = vsel %vm289, %v283, 0
        %v297 = vsel %vm289, %v284, 0
        %299 = vmatprep.subr.bf16.mxu0 %v294
        %300 = vmatpush1.bf16.msra.mxu0 %v291
        %301 = vmatprep.subr.bf16.mxu0 0
        %302 = vmatpush1.bf16.msra.mxu0 0
        %303 = vmatprep.subr.bf16.mxu0 0
        %304 = vmatpush1.bf16.msra.mxu0 0
        %305 = vmatprep.subr.bf16.mxu0 0
        %306 = vmatpush1.bf16.msra.mxu0 0
        %307 = vmatprep.subr.bf16.mxu0 0
        %308 = vmatpush1.bf16.msra.mxu0 0
        %309 = vmatprep.subr.bf16.mxu0 0
        %310 = vmatpush1.bf16.msra.mxu0 0
        %311 = vmatprep.subr.bf16.mxu0 0
        %312 = vmatpush1.bf16.msra.mxu0 0
        %313 = vmatprep.subr.bf16.mxu0 0
        %314 = vmatpush1.bf16.msra.mxu0 0
        %315 = vmatprep.subr.bf16.mxu0 0
        %316 = vmatpush1.bf16.msra.mxu0 0
        %317 = vmatprep.subr.bf16.mxu0 0
        %318 = vmatpush1.bf16.msra.mxu0 0
        %319 = vmatprep.subr.bf16.mxu0 0
        %320 = vmatpush1.bf16.msra.mxu0 0
        %321 = vmatprep.subr.bf16.mxu0 0
        %322 = vmatpush1.bf16.msra.mxu0 0
        %323 = vmatprep.subr.bf16.mxu0 0
        %324 = vmatpush1.bf16.msra.mxu0 0
        %325 = vmatprep.subr.bf16.mxu0 0
        %326 = vmatpush1.bf16.msra.mxu0 0
        %327 = vmatprep.subr.bf16.mxu0 0
        %328 = vmatpush1.bf16.msra.mxu0 0
        %329 = vmatprep.subr.bf16.mxu0 0
        %330 = vmatpush1.bf16.msra.mxu0 0
        %331 = vmatprep.mubr.bf16.mxu0 0
        %332 = vmatmul.mubr.bf16.gmra.mrb[0].mxu0 %v287
        %v333 = vpop.f32.mrb[0].mxu0
        %v334 = vadd.f32 0.0, %v333
        %v335 = vpop.f32.mrb[0].mxu0
        %v336 = vadd.f32 0.0, %v335
        %v337 = vpop.f32.mrb[0].mxu0
        %v338 = vpop.f32.mrb[0].mxu0
        %339 = vdwg.mxu0
        %340 = vmatprep.subr.bf16.mxu0 0
        %341 = vmatpush1.bf16.msra.mxu0 %v297
        %342 = vmatprep.subr.bf16.mxu0 0
        %343 = vmatpush1.bf16.msra.mxu0 0
        %344 = vmatprep.subr.bf16.mxu0 0
        %345 = vmatpush1.bf16.msra.mxu0 0
        %346 = vmatprep.subr.bf16.mxu0 0
        %347 = vmatpush1.bf16.msra.mxu0 0
        %348 = vmatprep.subr.bf16.mxu0 0
        %349 = vmatpush1.bf16.msra.mxu0 0
        %350 = vmatprep.subr.bf16.mxu0 0
        %351 = vmatpush1.bf16.msra.mxu0 0
        %352 = vmatprep.subr.bf16.mxu0 0
        %353 = vmatpush1.bf16.msra.mxu0 0
        %354 = vmatprep.subr.bf16.mxu0 0
        %355 = vmatpush1.bf16.msra.mxu0 0
        %356 = vmatprep.subr.bf16.mxu0 0
        %357 = vmatpush1.bf16.msra.mxu0 0
        %358 = vmatprep.subr.bf16.mxu0 0
        %359 = vmatpush1.bf16.msra.mxu0 0
        %360 = vmatprep.subr.bf16.mxu0 0
        %361 = vmatpush1.bf16.msra.mxu0 0
        %362 = vmatprep.subr.bf16.mxu0 0
        %363 = vmatpush1.bf16.msra.mxu0 0
        %364 = vmatprep.subr.bf16.mxu0 0
        %365 = vmatpush1.bf16.msra.mxu0 0
        %366 = vmatprep.subr.bf16.mxu0 0
        %367 = vmatpush1.bf16.msra.mxu0 0
        %368 = vmatprep.subr.bf16.mxu0 0
        %369 = vmatpush1.bf16.msra.mxu0 0
        %370 = vmatprep.subr.bf16.mxu0 0
        %371 = vmatpush1.bf16.msra.mxu0 0
        %372 = vmatprep.mubr.bf16.mxu0 0
        %373 = vmatmul.mubr.bf16.gmra.mrb[0].mxu0 %v287
        %v374 = vpop.f32.mrb[0].mxu0
        %v375 = vadd.f32 0.0, %v374
        %v376 = vpop.f32.mrb[0].mxu0
        %v377 = vpop.f32.mrb[0].mxu0
        %v378 = vpop.f32.mrb[0].mxu0
        %379 = vdwg.mxu0
        %v381 = vsel %vm285, %v266, 0
        %v384 = vsel %vm289, %v267, 0
        %v387 = vsel %vm289, %v268, 0
        %v390 = vsel %vm289, %v269, 0
        %392 = vmatprep.subr.bf16.mxu0 %v387
        %393 = vmatpush1.bf16.msra.mxu0 %v384
        %394 = vmatprep.subr.bf16.mxu0 0
        %395 = vmatpush1.bf16.msra.mxu0 0
        %396 = vmatprep.subr.bf16.mxu0 0
        %397 = vmatpush1.bf16.msra.mxu0 0
        %398 = vmatprep.subr.bf16.mxu0 0
        %399 = vmatpush1.bf16.msra.mxu0 0
        %400 = vmatprep.subr.bf16.mxu0 0
        %401 = vmatpush1.bf16.msra.mxu0 0
        %402 = vmatprep.subr.bf16.mxu0 0
        %403 = vmatpush1.bf16.msra.mxu0 0
        %404 = vmatprep.subr.bf16.mxu0 0
        %405 = vmatpush1.bf16.msra.mxu0 0
        %406 = vmatprep.subr.bf16.mxu0 0
        %407 = vmatpush1.bf16.msra.mxu0 0
        %408 = vmatprep.subr.bf16.mxu0 0
        %409 = vmatpush1.bf16.msra.mxu0 0
        %410 = vmatprep.subr.bf16.mxu0 0
        %411 = vmatpush1.bf16.msra.mxu0 0
        %412 = vmatprep.subr.bf16.mxu0 0
        %413 = vmatpush1.bf16.msra.mxu0 0
        %414 = vmatprep.subr.bf16.mxu0 0
        %415 = vmatpush1.bf16.msra.mxu0 0
        %416 = vmatprep.subr.bf16.mxu0 0
        %417 = vmatpush1.bf16.msra.mxu0 0
        %418 = vmatprep.subr.bf16.mxu0 0
        %419 = vmatpush1.bf16.msra.mxu0 0
        %420 = vmatprep.subr.bf16.mxu0 0
        %421 = vmatpush1.bf16.msra.mxu0 0
        %422 = vmatprep.subr.bf16.mxu0 0
        %423 = vmatpush1.bf16.msra.mxu0 0
        %424 = vmatprep.mubr.bf16.mxu0 0
        %425 = vmatmul.mubr.bf16.gmra.mrb[0].mxu0 %v381
        %v426 = vpop.f32.mrb[0].mxu0
        %v427 = vadd.f32 %v334, %v426
        %v428 = vpop.f32.mrb[0].mxu0
        %v429 = vadd.f32 %v336, %v428
        %v430 = vpop.f32.mrb[0].mxu0
        %v431 = vpop.f32.mrb[0].mxu0
        %432 = vdwg.mxu0
        %433 = vmatprep.subr.bf16.mxu0 0
        %434 = vmatpush1.bf16.msra.mxu0 %v390
        %435 = vmatprep.subr.bf16.mxu0 0
        %436 = vmatpush1.bf16.msra.mxu0 0
        %437 = vmatprep.subr.bf16.mxu0 0
        %438 = vmatpush1.bf16.msra.mxu0 0
        %439 = vmatprep.subr.bf16.mxu0 0
        %440 = vmatpush1.bf16.msra.mxu0 0
        %441 = vmatprep.subr.bf16.mxu0 0
        %442 = vmatpush1.bf16.msra.mxu0 0
        %443 = vmatprep.subr.bf16.mxu0 0
        %444 = vmatpush1.bf16.msra.mxu0 0
        %445 = vmatprep.subr.bf16.mxu0 0
        %446 = vmatpush1.bf16.msra.mxu0 0
        %447 = vmatprep.subr.bf16.mxu0 0
        %448 = vmatpush1.bf16.msra.mxu0 0
        %449 = vmatprep.subr.bf16.mxu0 0
        %450 = vmatpush1.bf16.msra.mxu0 0
        %451 = vmatprep.subr.bf16.mxu0 0
        %452 = vmatpush1.bf16.msra.mxu0 0
        %453 = vmatprep.subr.bf16.mxu0 0
        %454 = vmatpush1.bf16.msra.mxu0 0
        %455 = vmatprep.subr.bf16.mxu0 0
        %456 = vmatpush1.bf16.msra.mxu0 0
        %457 = vmatprep.subr.bf16.mxu0 0
        %458 = vmatpush1.bf16.msra.mxu0 0
        %459 = vmatprep.subr.bf16.mxu0 0
        %460 = vmatpush1.bf16.msra.mxu0 0
        %461 = vmatprep.subr.bf16.mxu0 0
        %462 = vmatpush1.bf16.msra.mxu0 0
        %463 = vmatprep.subr.bf16.mxu0 0
        %464 = vmatpush1.bf16.msra.mxu0 0
        %465 = vmatprep.mubr.bf16.mxu0 0
        %466 = vmatmul.mubr.bf16.gmra.mrb[0].mxu0 %v381
        %v467 = vpop.f32.mrb[0].mxu0
        %v468 = vadd.f32 %v375, %v467
        %v469 = vpop.f32.mrb[0].mxu0
        %v470 = vpop.f32.mrb[0].mxu0
        %v471 = vpop.f32.mrb[0].mxu0
        %472 = vdwg.mxu0
        %473 = vrot.lane.b32.xlu0 %v251, 17
        %v474 = vpop.permute.xlu0 %473
        %475 = vrot.lane.b32.xlu0 %v252, 17
        %v476 = vpop.permute.xlu0 %475
        %477 = vrot.lane.b32.xlu0 %v253, 17
        %v478 = vpop.permute.xlu0 %477
        %vm479 = vcmp.lt.s32.totalorder %v261, 17
        %v480 = vsel %vm479, %v476, %v478
        %v481 = vsel %vm479, %v474, %v476
        %v482 = vsel %vm479, %v478, %v474
        %s483 = scalar_lea.vmem %s1, 8
        %v484 = vld [vmem:[%s483] sm:$0xf]
        %v485 = vpack.c.bf16 %v482, %v482
        %v486 = vpack.c.bf16 %v481, %v481
        %v487 = vpack.c.bf16 %v480, %v480
        %v489 = vsel %vm285, %v484, 0
        %v492 = vsel %vm289, %v485, 0
        %v495 = vsel %vm289, %v486, 0
        %v498 = vsel %vm289, %v487, 0
        %500 = vmatprep.subr.bf16.mxu0 %v495
        %501 = vmatpush1.bf16.msra.mxu0 %v492
        %502 = vmatprep.subr.bf16.mxu0 0
        %503 = vmatpush1.bf16.msra.mxu0 0
        %504 = vmatprep.subr.bf16.mxu0 0
        %505 = vmatpush1.bf16.msra.mxu0 0
        %506 = vmatprep.subr.bf16.mxu0 0
        %507 = vmatpush1.bf16.msra.mxu0 0
        %508 = vmatprep.subr.bf16.mxu0 0
        %509 = vmatpush1.bf16.msra.mxu0 0
        %510 = vmatprep.subr.bf16.mxu0 0
        %511 = vmatpush1.bf16.msra.mxu0 0
        %512 = vmatprep.subr.bf16.mxu0 0
        %513 = vmatpush1.bf16.msra.mxu0 0
        %514 = vmatprep.subr.bf16.mxu0 0
        %515 = vmatpush1.bf16.msra.mxu0 0
        %516 = vmatprep.subr.bf16.mxu0 0
        %517 = vmatpush1.bf16.msra.mxu0 0
        %518 = vmatprep.subr.bf16.mxu0 0
        %519 = vmatpush1.bf16.msra.mxu0 0
        %520 = vmatprep.subr.bf16.mxu0 0
        %521 = vmatpush1.bf16.msra.mxu0 0
        %522 = vmatprep.subr.bf16.mxu0 0
        %523 = vmatpush1.bf16.msra.mxu0 0
        %524 = vmatprep.subr.bf16.mxu0 0
        %525 = vmatpush1.bf16.msra.mxu0 0
        %526 = vmatprep.subr.bf16.mxu0 0
        %527 = vmatpush1.bf16.msra.mxu0 0
        %528 = vmatprep.subr.bf16.mxu0 0
        %529 = vmatpush1.bf16.msra.mxu0 0
        %530 = vmatprep.subr.bf16.mxu0 0
        %531 = vmatpush1.bf16.msra.mxu0 0
        %532 = vmatprep.mubr.bf16.mxu0 0
        %533 = vmatmul.mubr.bf16.gmra.mrb[0].mxu0 %v489
        %v534 = vpop.f32.mrb[0].mxu0
        %v535 = vadd.f32 0.0, %v534
        %v536 = vpop.f32.mrb[0].mxu0
        %v537 = vadd.f32 0.0, %v536
        %v538 = vpop.f32.mrb[0].mxu0
        %v539 = vpop.f32.mrb[0].mxu0
        %540 = vdwg.mxu0
        %541 = vmatprep.subr.bf16.mxu0 0
        %542 = vmatpush1.bf16.msra.mxu0 %v498
        %543 = vmatprep.subr.bf16.mxu0 0
        %544 = vmatpush1.bf16.msra.mxu0 0
        %545 = vmatprep.subr.bf16.mxu0 0
        %546 = vmatpush1.bf16.msra.mxu0 0
        %547 = vmatprep.subr.bf16.mxu0 0
        %548 = vmatpush1.bf16.msra.mxu0 0
        %549 = vmatprep.subr.bf16.mxu0 0
        %550 = vmatpush1.bf16.msra.mxu0 0
        %551 = vmatprep.subr.bf16.mxu0 0
        %552 = vmatpush1.bf16.msra.mxu0 0
        %553 = vmatprep.subr.bf16.mxu0 0
        %554 = vmatpush1.bf16.msra.mxu0 0
        %555 = vmatprep.subr.bf16.mxu0 0
        %556 = vmatpush1.bf16.msra.mxu0 0
        %557 = vmatprep.subr.bf16.mxu0 0
        %558 = vmatpush1.bf16.msra.mxu0 0
        %559 = vmatprep.subr.bf16.mxu0 0
        %560 = vmatpush1.bf16.msra.mxu0 0
        %561 = vmatprep.subr.bf16.mxu0 0
        %562 = vmatpush1.bf16.msra.mxu0 0
        %563 = vmatprep.subr.bf16.mxu0 0
        %564 = vmatpush1.bf16.msra.mxu0 0
        %565 = vmatprep.subr.bf16.mxu0 0
        %566 = vmatpush1.bf16.msra.mxu0 0
        %567 = vmatprep.subr.bf16.mxu0 0
        %568 = vmatpush1.bf16.msra.mxu0 0
        %569 = vmatprep.subr.bf16.mxu0 0
        %570 = vmatpush1.bf16.msra.mxu0 0
        %571 = vmatprep.subr.bf16.mxu0 0
        %572 = vmatpush1.bf16.msra.mxu0 0
        %573 = vmatprep.mubr.bf16.mxu0 0
        %574 = vmatmul.mubr.bf16.gmra.mrb[0].mxu0 %v489
        %v575 = vpop.f32.mrb[0].mxu0
        %v576 = vadd.f32 0.0, %v575
        %v577 = vpop.f32.mrb[0].mxu0
        %v578 = vpop.f32.mrb[0].mxu0
        %v579 = vpop.f32.mrb[0].mxu0
        %580 = vdwg.mxu0
        %v581 = vadd.f32 %v427, %v535
        %v582 = vadd.f32 %v429, %v537
        %v583 = vadd.f32 %v468, %v576
        %584 = vrot.lane.b32.xlu0 %v251, 1
        %v585 = vpop.permute.xlu0 %584
        %586 = vrot.lane.b32.xlu0 %v252, 1
        %v587 = vpop.permute.xlu0 %586
        %588 = vrot.lane.b32.xlu0 %v253, 1
        %v589 = vpop.permute.xlu0 %588
        %vm590 = vcmp.lt.s32.totalorder %v261, 1
        %v591 = vsel %vm590, %v587, %v589
        %v592 = vsel %vm590, %v585, %v587
        %v593 = vsel %vm590, %v589, %v585
        %s594 = scalar_lea.vmem %s1, 12
        %v595 = vld [vmem:[%s594] sm:$0xf]
        %v596 = vpack.c.bf16 %v593, %v593
        %v597 = vpack.c.bf16 %v592, %v592
        %v598 = vpack.c.bf16 %v591, %v591
        %v600 = vsel %vm285, %v595, 0
        %v603 = vsel %vm289, %v596, 0
        %v606 = vsel %vm289, %v597, 0
        %v609 = vsel %vm289, %v598, 0
        %611 = vmatprep.subr.bf16.mxu0 %v606
        %612 = vmatpush1.bf16.msra.mxu0 %v603
        %613 = vmatprep.subr.bf16.mxu0 0
        %614 = vmatpush1.bf16.msra.mxu0 0
        %615 = vmatprep.subr.bf16.mxu0 0
        %616 = vmatpush1.bf16.msra.mxu0 0
        %617 = vmatprep.subr.bf16.mxu0 0
        %618 = vmatpush1.bf16.msra.mxu0 0
        %619 = vmatprep.subr.bf16.mxu0 0
        %620 = vmatpush1.bf16.msra.mxu0 0
        %621 = vmatprep.subr.bf16.mxu0 0
        %622 = vmatpush1.bf16.msra.mxu0 0
        %623 = vmatprep.subr.bf16.mxu0 0
        %624 = vmatpush1.bf16.msra.mxu0 0
        %625 = vmatprep.subr.bf16.mxu0 0
        %626 = vmatpush1.bf16.msra.mxu0 0
        %627 = vmatprep.subr.bf16.mxu0 0
        %628 = vmatpush1.bf16.msra.mxu0 0
        %629 = vmatprep.subr.bf16.mxu0 0
        %630 = vmatpush1.bf16.msra.mxu0 0
        %631 = vmatprep.subr.bf16.mxu0 0
        %632 = vmatpush1.bf16.msra.mxu0 0
        %633 = vmatprep.subr.bf16.mxu0 0
        %634 = vmatpush1.bf16.msra.mxu0 0
        %635 = vmatprep.subr.bf16.mxu0 0
        %636 = vmatpush1.bf16.msra.mxu0 0
        %637 = vmatprep.subr.bf16.mxu0 0
        %638 = vmatpush1.bf16.msra.mxu0 0
        %639 = vmatprep.subr.bf16.mxu0 0
        %640 = vmatpush1.bf16.msra.mxu0 0
        %641 = vmatprep.subr.bf16.mxu0 0
        %642 = vmatpush1.bf16.msra.mxu0 0
        %643 = vmatprep.mubr.bf16.mxu0 0
        %644 = vmatmul.mubr.bf16.gmra.mrb[0].mxu0 %v600
        %v645 = vpop.f32.mrb[0].mxu0
        %v646 = vadd.f32 0.0, %v645
        %v647 = vpop.f32.mrb[0].mxu0
        %v648 = vadd.f32 0.0, %v647
        %v649 = vpop.f32.mrb[0].mxu0
        %v650 = vpop.f32.mrb[0].mxu0
        %651 = vdwg.mxu0
        %652 = vmatprep.subr.bf16.mxu0 0
        %653 = vmatpush1.bf16.msra.mxu0 %v609
        %654 = vmatprep.subr.bf16.mxu0 0
        %655 = vmatpush1.bf16.msra.mxu0 0
        %656 = vmatprep.subr.bf16.mxu0 0
        %657 = vmatpush1.bf16.msra.mxu0 0
        %658 = vmatprep.subr.bf16.mxu0 0
        %659 = vmatpush1.bf16.msra.mxu0 0
        %660 = vmatprep.subr.bf16.mxu0 0
        %661 = vmatpush1.bf16.msra.mxu0 0
        %662 = vmatprep.subr.bf16.mxu0 0
        %663 = vmatpush1.bf16.msra.mxu0 0
        %664 = vmatprep.subr.bf16.mxu0 0
        %665 = vmatpush1.bf16.msra.mxu0 0
        %666 = vmatprep.subr.bf16.mxu0 0
        %667 = vmatpush1.bf16.msra.mxu0 0
        %668 = vmatprep.subr.bf16.mxu0 0
        %669 = vmatpush1.bf16.msra.mxu0 0
        %670 = vmatprep.subr.bf16.mxu0 0
        %671 = vmatpush1.bf16.msra.mxu0 0
        %672 = vmatprep.subr.bf16.mxu0 0
        %673 = vmatpush1.bf16.msra.mxu0 0
        %674 = vmatprep.subr.bf16.mxu0 0
        %675 = vmatpush1.bf16.msra.mxu0 0
        %676 = vmatprep.subr.bf16.mxu0 0
        %677 = vmatpush1.bf16.msra.mxu0 0
        %678 = vmatprep.subr.bf16.mxu0 0
        %679 = vmatpush1.bf16.msra.mxu0 0
        %680 = vmatprep.subr.bf16.mxu0 0
        %681 = vmatpush1.bf16.msra.mxu0 0
        %682 = vmatprep.subr.bf16.mxu0 0
        %683 = vmatpush1.bf16.msra.mxu0 0
        %684 = vmatprep.mubr.bf16.mxu0 0
        %685 = vmatmul.mubr.bf16.gmra.mrb[0].mxu0 %v600
        %v686 = vpop.f32.mrb[0].mxu0
        %v687 = vadd.f32 0.0, %v686
        %v688 = vpop.f32.mrb[0].mxu0
        %v689 = vpop.f32.mrb[0].mxu0
        %v690 = vpop.f32.mrb[0].mxu0
        %691 = vdwg.mxu0
        %v692 = vadd.f32 %v581, %v646
        %v693 = vadd.f32 %v582, %v648
        %v694 = vadd.f32 %v583, %v687
        %s695 = scalar_lea.vmem %s1, 16
        %v696 = vld [vmem:[%s695] sm:$0xf]
        %v697 = vpack.c.bf16 %v251, %v251
        %v698 = vpack.c.bf16 %v252, %v252
        %v699 = vpack.c.bf16 %v253, %v253
        %v701 = vsel %vm285, %v696, 0
        %v704 = vsel %vm289, %v697, 0
        %v707 = vsel %vm289, %v698, 0
        %v710 = vsel %vm289, %v699, 0
        %712 = vmatprep.subr.bf16.mxu0 %v707
        %713 = vmatpush1.bf16.msra.mxu0 %v704
        %714 = vmatprep.subr.bf16.mxu0 0
        %715 = vmatpush1.bf16.msra.mxu0 0
        %716 = vmatprep.subr.bf16.mxu0 0
        %717 = vmatpush1.bf16.msra.mxu0 0
        %718 = vmatprep.subr.bf16.mxu0 0
        %719 = vmatpush1.bf16.msra.mxu0 0
        %720 = vmatprep.subr.bf16.mxu0 0
        %721 = vmatpush1.bf16.msra.mxu0 0
        %722 = vmatprep.subr.bf16.mxu0 0
        %723 = vmatpush1.bf16.msra.mxu0 0
        %724 = vmatprep.subr.bf16.mxu0 0
        %725 = vmatpush1.bf16.msra.mxu0 0
        %726 = vmatprep.subr.bf16.mxu0 0
        %727 = vmatpush1.bf16.msra.mxu0 0
        %728 = vmatprep.subr.bf16.mxu0 0
        %729 = vmatpush1.bf16.msra.mxu0 0
        %730 = vmatprep.subr.bf16.mxu0 0
        %731 = vmatpush1.bf16.msra.mxu0 0
        %732 = vmatprep.subr.bf16.mxu0 0
        %733 = vmatpush1.bf16.msra.mxu0 0
        %734 = vmatprep.subr.bf16.mxu0 0
        %735 = vmatpush1.bf16.msra.mxu0 0
        %736 = vmatprep.subr.bf16.mxu0 0
        %737 = vmatpush1.bf16.msra.mxu0 0
        %738 = vmatprep.subr.bf16.mxu0 0
        %739 = vmatpush1.bf16.msra.mxu0 0
        %740 = vmatprep.subr.bf16.mxu0 0
        %741 = vmatpush1.bf16.msra.mxu0 0
        %742 = vmatprep.subr.bf16.mxu0 0
        %743 = vmatpush1.bf16.msra.mxu0 0
        %744 = vmatprep.mubr.bf16.mxu0 0
        %745 = vmatmul.mubr.bf16.gmra.mrb[0].mxu0 %v701
        %v746 = vpop.f32.mrb[0].mxu0
        %v747 = vadd.f32 0.0, %v746
        %v748 = vpop.f32.mrb[0].mxu0
        %v749 = vadd.f32 0.0, %v748
        %v750 = vpop.f32.mrb[0].mxu0
        %v751 = vpop.f32.mrb[0].mxu0
        %752 = vdwg.mxu0
        %753 = vmatprep.subr.bf16.mxu0 0
        %754 = vmatpush1.bf16.msra.mxu0 %v710
        %755 = vmatprep.subr.bf16.mxu0 0
        %756 = vmatpush1.bf16.msra.mxu0 0
        %757 = vmatprep.subr.bf16.mxu0 0
        %758 = vmatpush1.bf16.msra.mxu0 0
        %759 = vmatprep.subr.bf16.mxu0 0
        %760 = vmatpush1.bf16.msra.mxu0 0
        %761 = vmatprep.subr.bf16.mxu0 0
        %762 = vmatpush1.bf16.msra.mxu0 0
        %763 = vmatprep.subr.bf16.mxu0 0
        %764 = vmatpush1.bf16.msra.mxu0 0
        %765 = vmatprep.subr.bf16.mxu0 0
        %766 = vmatpush1.bf16.msra.mxu0 0
        %767 = vmatprep.subr.bf16.mxu0 0
        %768 = vmatpush1.bf16.msra.mxu0 0
        %769 = vmatprep.subr.bf16.mxu0 0
        %770 = vmatpush1.bf16.msra.mxu0 0
        %771 = vmatprep.subr.bf16.mxu0 0
        %772 = vmatpush1.bf16.msra.mxu0 0
        %773 = vmatprep.subr.bf16.mxu0 0
        %774 = vmatpush1.bf16.msra.mxu0 0
        %775 = vmatprep.subr.bf16.mxu0 0
        %776 = vmatpush1.bf16.msra.mxu0 0
        %777 = vmatprep.subr.bf16.mxu0 0
        %778 = vmatpush1.bf16.msra.mxu0 0
        %779 = vmatprep.subr.bf16.mxu0 0
        %780 = vmatpush1.bf16.msra.mxu0 0
        %781 = vmatprep.subr.bf16.mxu0 0
        %782 = vmatpush1.bf16.msra.mxu0 0
        %783 = vmatprep.subr.bf16.mxu0 0
        %784 = vmatpush1.bf16.msra.mxu0 0
        %785 = vmatprep.mubr.bf16.mxu0 0
        %786 = vmatmul.mubr.bf16.gmra.mrb[0].mxu0 %v701
        %v787 = vpop.f32.mrb[0].mxu0
        %v788 = vadd.f32 0.0, %v787
        %v789 = vpop.f32.mrb[0].mxu0
        %v790 = vpop.f32.mrb[0].mxu0
        %v791 = vpop.f32.mrb[0].mxu0
        %792 = vdwg.mxu0
        %v793 = vadd.f32 %v692, %v747
        %v794 = vadd.f32 %v693, %v749
        %v795 = vadd.f32 %v694, %v788
        %796 = vrot.lane.b32.xlu0 %v251, 127
        %v797 = vpop.permute.xlu0 %796
        %798 = vrot.lane.b32.xlu0 %v252, 127
        %v799 = vpop.permute.xlu0 %798
        %800 = vrot.lane.b32.xlu0 %v253, 127
        %v801 = vpop.permute.xlu0 %800
        %vm802 = vcmp.lt.s32.totalorder %v261, 127
        %v803 = vsel %vm802, %v799, %v801
        %v804 = vsel %vm802, %v797, %v799
        %v805 = vsel %vm802, %v801, %v797
        %s806 = scalar_lea.vmem %s1, 20
        %v807 = vld [vmem:[%s806] sm:$0xf]
        %v808 = vpack.c.bf16 %v804, %v804
        %v809 = vpack.c.bf16 %v803, %v803
        %v810 = vpack.c.bf16 %v805, %v805
        %v812 = vsel %vm285, %v807, 0
        %v815 = vsel %vm289, %v808, 0
        %v818 = vsel %vm289, %v809, 0
        %v821 = vsel %vm289, %v810, 0
        %823 = vmatprep.subr.bf16.mxu0 %v818
        %824 = vmatpush1.bf16.msra.mxu0 %v815
        %825 = vmatprep.subr.bf16.mxu0 0
        %826 = vmatpush1.bf16.msra.mxu0 0
        %827 = vmatprep.subr.bf16.mxu0 0
        %828 = vmatpush1.bf16.msra.mxu0 0
        %829 = vmatprep.subr.bf16.mxu0 0
        %830 = vmatpush1.bf16.msra.mxu0 0
        %831 = vmatprep.subr.bf16.mxu0 0
        %832 = vmatpush1.bf16.msra.mxu0 0
        %833 = vmatprep.subr.bf16.mxu0 0
        %834 = vmatpush1.bf16.msra.mxu0 0
        %835 = vmatprep.subr.bf16.mxu0 0
        %836 = vmatpush1.bf16.msra.mxu0 0
        %837 = vmatprep.subr.bf16.mxu0 0
        %838 = vmatpush1.bf16.msra.mxu0 0
        %839 = vmatprep.subr.bf16.mxu0 0
        %840 = vmatpush1.bf16.msra.mxu0 0
        %841 = vmatprep.subr.bf16.mxu0 0
        %842 = vmatpush1.bf16.msra.mxu0 0
        %843 = vmatprep.subr.bf16.mxu0 0
        %844 = vmatpush1.bf16.msra.mxu0 0
        %845 = vmatprep.subr.bf16.mxu0 0
        %846 = vmatpush1.bf16.msra.mxu0 0
        %847 = vmatprep.subr.bf16.mxu0 0
        %848 = vmatpush1.bf16.msra.mxu0 0
        %849 = vmatprep.subr.bf16.mxu0 0
        %850 = vmatpush1.bf16.msra.mxu0 0
        %851 = vmatprep.subr.bf16.mxu0 0
        %852 = vmatpush1.bf16.msra.mxu0 0
        %853 = vmatprep.subr.bf16.mxu0 0
        %854 = vmatpush1.bf16.msra.mxu0 0
        %855 = vmatprep.mubr.bf16.mxu0 0
        %856 = vmatmul.mubr.bf16.gmra.mrb[0].mxu0 %v812
        %v857 = vpop.f32.mrb[0].mxu0
        %v858 = vadd.f32 0.0, %v857
        %v859 = vpop.f32.mrb[0].mxu0
        %v860 = vadd.f32 0.0, %v859
        %v861 = vpop.f32.mrb[0].mxu0
        %v862 = vpop.f32.mrb[0].mxu0
        %863 = vdwg.mxu0
        %864 = vmatprep.subr.bf16.mxu0 0
        %865 = vmatpush1.bf16.msra.mxu0 %v821
        %866 = vmatprep.subr.bf16.mxu0 0
        %867 = vmatpush1.bf16.msra.mxu0 0
        %868 = vmatprep.subr.bf16.mxu0 0
        %869 = vmatpush1.bf16.msra.mxu0 0
        %870 = vmatprep.subr.bf16.mxu0 0
        %871 = vmatpush1.bf16.msra.mxu0 0
        %872 = vmatprep.subr.bf16.mxu0 0
        %873 = vmatpush1.bf16.msra.mxu0 0
        %874 = vmatprep.subr.bf16.mxu0 0
        %875 = vmatpush1.bf16.msra.mxu0 0
        %876 = vmatprep.subr.bf16.mxu0 0
        %877 = vmatpush1.bf16.msra.mxu0 0
        %878 = vmatprep.subr.bf16.mxu0 0
        %879 = vmatpush1.bf16.msra.mxu0 0
        %880 = vmatprep.subr.bf16.mxu0 0
        %881 = vmatpush1.bf16.msra.mxu0 0
        %882 = vmatprep.subr.bf16.mxu0 0
        %883 = vmatpush1.bf16.msra.mxu0 0
        %884 = vmatprep.subr.bf16.mxu0 0
        %885 = vmatpush1.bf16.msra.mxu0 0
        %886 = vmatprep.subr.bf16.mxu0 0
        %887 = vmatpush1.bf16.msra.mxu0 0
        %888 = vmatprep.subr.bf16.mxu0 0
        %889 = vmatpush1.bf16.msra.mxu0 0
        %890 = vmatprep.subr.bf16.mxu0 0
        %891 = vmatpush1.bf16.msra.mxu0 0
        %892 = vmatprep.subr.bf16.mxu0 0
        %893 = vmatpush1.bf16.msra.mxu0 0
        %894 = vmatprep.subr.bf16.mxu0 0
        %895 = vmatpush1.bf16.msra.mxu0 0
        %896 = vmatprep.mubr.bf16.mxu0 0
        %897 = vmatmul.mubr.bf16.gmra.mrb[0].mxu0 %v812
        %v898 = vpop.f32.mrb[0].mxu0
        %v899 = vadd.f32 0.0, %v898
        %v900 = vpop.f32.mrb[0].mxu0
        %v901 = vpop.f32.mrb[0].mxu0
        %v902 = vpop.f32.mrb[0].mxu0
        %903 = vdwg.mxu0
        %v904 = vadd.f32 %v793, %v858
        %v905 = vadd.f32 %v794, %v860
        %v906 = vadd.f32 %v795, %v899
        %907 = vrot.lane.b32.xlu0 %v251, 111
        %v908 = vpop.permute.xlu0 %907
        %909 = vrot.lane.b32.xlu0 %v252, 111
        %v910 = vpop.permute.xlu0 %909
        %911 = vrot.lane.b32.xlu0 %v253, 111
        %v912 = vpop.permute.xlu0 %911
        %vm913 = vcmp.lt.s32.totalorder %v261, 111
        %v914 = vsel %vm913, %v910, %v912
        %v915 = vsel %vm913, %v908, %v910
        %v916 = vsel %vm913, %v912, %v908
        %s917 = scalar_lea.vmem %s1, 24
        %v918 = vld [vmem:[%s917] sm:$0xf]
        %v919 = vpack.c.bf16 %v915, %v915
        %v920 = vpack.c.bf16 %v914, %v914
        %v921 = vpack.c.bf16 %v916, %v916
        %v923 = vsel %vm285, %v918, 0
        %v926 = vsel %vm289, %v919, 0
        %v929 = vsel %vm289, %v920, 0
        %v932 = vsel %vm289, %v921, 0
        %934 = vmatprep.subr.bf16.mxu0 %v929
        %935 = vmatpush1.bf16.msra.mxu0 %v926
        %936 = vmatprep.subr.bf16.mxu0 0
        %937 = vmatpush1.bf16.msra.mxu0 0
        %938 = vmatprep.subr.bf16.mxu0 0
        %939 = vmatpush1.bf16.msra.mxu0 0
        %940 = vmatprep.subr.bf16.mxu0 0
        %941 = vmatpush1.bf16.msra.mxu0 0
        %942 = vmatprep.subr.bf16.mxu0 0
        %943 = vmatpush1.bf16.msra.mxu0 0
        %944 = vmatprep.subr.bf16.mxu0 0
        %945 = vmatpush1.bf16.msra.mxu0 0
        %946 = vmatprep.subr.bf16.mxu0 0
        %947 = vmatpush1.bf16.msra.mxu0 0
        %948 = vmatprep.subr.bf16.mxu0 0
        %949 = vmatpush1.bf16.msra.mxu0 0
        %950 = vmatprep.subr.bf16.mxu0 0
        %951 = vmatpush1.bf16.msra.mxu0 0
        %952 = vmatprep.subr.bf16.mxu0 0
        %953 = vmatpush1.bf16.msra.mxu0 0
        %954 = vmatprep.subr.bf16.mxu0 0
        %955 = vmatpush1.bf16.msra.mxu0 0
        %956 = vmatprep.subr.bf16.mxu0 0
        %957 = vmatpush1.bf16.msra.mxu0 0
        %958 = vmatprep.subr.bf16.mxu0 0
        %959 = vmatpush1.bf16.msra.mxu0 0
        %960 = vmatprep.subr.bf16.mxu0 0
        %961 = vmatpush1.bf16.msra.mxu0 0
        %962 = vmatprep.subr.bf16.mxu0 0
        %963 = vmatpush1.bf16.msra.mxu0 0
        %964 = vmatprep.subr.bf16.mxu0 0
        %965 = vmatpush1.bf16.msra.mxu0 0
        %966 = vmatprep.mubr.bf16.mxu0 0
        %967 = vmatmul.mubr.bf16.gmra.mrb[0].mxu0 %v923
        %v968 = vpop.f32.mrb[0].mxu0
        %v969 = vadd.f32 0.0, %v968
        %v970 = vpop.f32.mrb[0].mxu0
        %v971 = vadd.f32 0.0, %v970
        %v972 = vpop.f32.mrb[0].mxu0
        %v973 = vpop.f32.mrb[0].mxu0
        %974 = vdwg.mxu0
        %975 = vmatprep.subr.bf16.mxu0 0
        %976 = vmatpush1.bf16.msra.mxu0 %v932
        %977 = vmatprep.subr.bf16.mxu0 0
        %978 = vmatpush1.bf16.msra.mxu0 0
        %979 = vmatprep.subr.bf16.mxu0 0
        %980 = vmatpush1.bf16.msra.mxu0 0
        %981 = vmatprep.subr.bf16.mxu0 0
        %982 = vmatpush1.bf16.msra.mxu0 0
        %983 = vmatprep.subr.bf16.mxu0 0
        %984 = vmatpush1.bf16.msra.mxu0 0
        %985 = vmatprep.subr.bf16.mxu0 0
        %986 = vmatpush1.bf16.msra.mxu0 0
        %987 = vmatprep.subr.bf16.mxu0 0
        %988 = vmatpush1.bf16.msra.mxu0 0
        %989 = vmatprep.subr.bf16.mxu0 0
        %990 = vmatpush1.bf16.msra.mxu0 0
        %991 = vmatprep.subr.bf16.mxu0 0
        %992 = vmatpush1.bf16.msra.mxu0 0
        %993 = vmatprep.subr.bf16.mxu0 0
        %994 = vmatpush1.bf16.msra.mxu0 0
        %995 = vmatprep.subr.bf16.mxu0 0
        %996 = vmatpush1.bf16.msra.mxu0 0
        %997 = vmatprep.subr.bf16.mxu0 0
        %998 = vmatpush1.bf16.msra.mxu0 0
        %999 = vmatprep.subr.bf16.mxu0 0
        %1000 = vmatpush1.bf16.msra.mxu0 0
        %1001 = vmatprep.subr.bf16.mxu0 0
        %1002 = vmatpush1.bf16.msra.mxu0 0
        %1003 = vmatprep.subr.bf16.mxu0 0
        %1004 = vmatpush1.bf16.msra.mxu0 0
        %1005 = vmatprep.subr.bf16.mxu0 0
        %1006 = vmatpush1.bf16.msra.mxu0 0
        %1007 = vmatprep.mubr.bf16.mxu0 0
        %1008 = vmatmul.mubr.bf16.gmra.mrb[0].mxu0 %v923
        %v1009 = vpop.f32.mrb[0].mxu0
        %v1010 = vadd.f32 0.0, %v1009
        %v1011 = vpop.f32.mrb[0].mxu0
        %v1012 = vpop.f32.mrb[0].mxu0
        %v1013 = vpop.f32.mrb[0].mxu0
        %1014 = vdwg.mxu0
        %v1015 = vadd.f32 %v904, %v969
        %v1016 = vadd.f32 %v905, %v971
        %v1017 = vadd.f32 %v906, %v1010
        %1018 = vrot.lane.b32.xlu0 %v251, 110
        %v1019 = vpop.permute.xlu0 %1018
        %1020 = vrot.lane.b32.xlu0 %v252, 110
        %v1021 = vpop.permute.xlu0 %1020
        %1022 = vrot.lane.b32.xlu0 %v253, 110
        %v1023 = vpop.permute.xlu0 %1022
        %vm1024 = vcmp.lt.s32.totalorder %v261, 110
        %v1025 = vsel %vm1024, %v1021, %v1023
        %v1026 = vsel %vm1024, %v1019, %v1021
        %v1027 = vsel %vm1024, %v1023, %v1019
        %s1028 = scalar_lea.vmem %s1, 28
        %v1029 = vld [vmem:[%s1028] sm:$0xf]
        %v1030 = vpack.c.bf16 %v1026, %v1026
        %v1031 = vpack.c.bf16 %v1025, %v1025
        %v1032 = vpack.c.bf16 %v1027, %v1027
        %v1034 = vsel %vm285, %v1029, 0
        %v1037 = vsel %vm289, %v1030, 0
        %v1040 = vsel %vm289, %v1031, 0
        %v1043 = vsel %vm289, %v1032, 0
        %1045 = vmatprep.subr.bf16.mxu0 %v1040
        %1046 = vmatpush1.bf16.msra.mxu0 %v1037
        %1047 = vmatprep.subr.bf16.mxu0 0
        %1048 = vmatpush1.bf16.msra.mxu0 0
        %1049 = vmatprep.subr.bf16.mxu0 0
        %1050 = vmatpush1.bf16.msra.mxu0 0
        %1051 = vmatprep.subr.bf16.mxu0 0
        %1052 = vmatpush1.bf16.msra.mxu0 0
        %1053 = vmatprep.subr.bf16.mxu0 0
        %1054 = vmatpush1.bf16.msra.mxu0 0
        %1055 = vmatprep.subr.bf16.mxu0 0
        %1056 = vmatpush1.bf16.msra.mxu0 0
        %1057 = vmatprep.subr.bf16.mxu0 0
        %1058 = vmatpush1.bf16.msra.mxu0 0
        %1059 = vmatprep.subr.bf16.mxu0 0
        %1060 = vmatpush1.bf16.msra.mxu0 0
        %1061 = vmatprep.subr.bf16.mxu0 0
        %1062 = vmatpush1.bf16.msra.mxu0 0
        %1063 = vmatprep.subr.bf16.mxu0 0
        %1064 = vmatpush1.bf16.msra.mxu0 0
        %1065 = vmatprep.subr.bf16.mxu0 0
        %1066 = vmatpush1.bf16.msra.mxu0 0
        %1067 = vmatprep.subr.bf16.mxu0 0
        %1068 = vmatpush1.bf16.msra.mxu0 0
        %1069 = vmatprep.subr.bf16.mxu0 0
        %1070 = vmatpush1.bf16.msra.mxu0 0
        %1071 = vmatprep.subr.bf16.mxu0 0
        %1072 = vmatpush1.bf16.msra.mxu0 0
        %1073 = vmatprep.subr.bf16.mxu0 0
        %1074 = vmatpush1.bf16.msra.mxu0 0
        %1075 = vmatprep.subr.bf16.mxu0 0
        %1076 = vmatpush1.bf16.msra.mxu0 0
        %1077 = vmatprep.mubr.bf16.mxu0 0
        %1078 = vmatmul.mubr.bf16.gmra.mrb[0].mxu0 %v1034
        %v1079 = vpop.f32.mrb[0].mxu0
        %v1080 = vadd.f32 0.0, %v1079
        %v1081 = vpop.f32.mrb[0].mxu0
        %v1082 = vadd.f32 0.0, %v1081
        %v1083 = vpop.f32.mrb[0].mxu0
        %v1084 = vpop.f32.mrb[0].mxu0
        %1085 = vdwg.mxu0
        %1086 = vmatprep.subr.bf16.mxu0 0
        %1087 = vmatpush1.bf16.msra.mxu0 %v1043
        %1088 = vmatprep.subr.bf16.mxu0 0
        %1089 = vmatpush1.bf16.msra.mxu0 0
        %1090 = vmatprep.subr.bf16.mxu0 0
        %1091 = vmatpush1.bf16.msra.mxu0 0
        %1092 = vmatprep.subr.bf16.mxu0 0
        %1093 = vmatpush1.bf16.msra.mxu0 0
        %1094 = vmatprep.subr.bf16.mxu0 0
        %1095 = vmatpush1.bf16.msra.mxu0 0
        %1096 = vmatprep.subr.bf16.mxu0 0
        %1097 = vmatpush1.bf16.msra.mxu0 0
        %1098 = vmatprep.subr.bf16.mxu0 0
        %1099 = vmatpush1.bf16.msra.mxu0 0
        %1100 = vmatprep.subr.bf16.mxu0 0
        %1101 = vmatpush1.bf16.msra.mxu0 0
        %1102 = vmatprep.subr.bf16.mxu0 0
        %1103 = vmatpush1.bf16.msra.mxu0 0
        %1104 = vmatprep.subr.bf16.mxu0 0
        %1105 = vmatpush1.bf16.msra.mxu0 0
        %1106 = vmatprep.subr.bf16.mxu0 0
        %1107 = vmatpush1.bf16.msra.mxu0 0
        %1108 = vmatprep.subr.bf16.mxu0 0
        %1109 = vmatpush1.bf16.msra.mxu0 0
        %1110 = vmatprep.subr.bf16.mxu0 0
        %1111 = vmatpush1.bf16.msra.mxu0 0
        %1112 = vmatprep.subr.bf16.mxu0 0
        %1113 = vmatpush1.bf16.msra.mxu0 0
        %1114 = vmatprep.subr.bf16.mxu0 0
        %1115 = vmatpush1.bf16.msra.mxu0 0
        %1116 = vmatprep.subr.bf16.mxu0 0
        %1117 = vmatpush1.bf16.msra.mxu0 0
        %1118 = vmatprep.mubr.bf16.mxu0 0
        %1119 = vmatmul.mubr.bf16.gmra.mrb[0].mxu0 %v1034
        %v1120 = vpop.f32.mrb[0].mxu0
        %v1121 = vadd.f32 0.0, %v1120
        %v1122 = vpop.f32.mrb[0].mxu0
        %v1123 = vpop.f32.mrb[0].mxu0
        %v1124 = vpop.f32.mrb[0].mxu0
        %1125 = vdwg.mxu0
        %v1126 = vadd.f32 %v1015, %v1080
        %v1127 = vadd.f32 %v1016, %v1082
        %v1128 = vadd.f32 %v1017, %v1121
        %1129 = vrot.lane.b32.xlu0 %v251, 109
        %v1130 = vpop.permute.xlu0 %1129
        %1131 = vrot.lane.b32.xlu0 %v252, 109
        %v1132 = vpop.permute.xlu0 %1131
        %1133 = vrot.lane.b32.xlu0 %v253, 109
        %v1134 = vpop.permute.xlu0 %1133
        %vm1135 = vcmp.lt.s32.totalorder %v261, 109
        %v1136 = vsel %vm1135, %v1132, %v1134
        %v1137 = vsel %vm1135, %v1130, %v1132
        %v1138 = vsel %vm1135, %v1134, %v1130
        %s1139 = scalar_lea.vmem %s1, 32
        %v1140 = vld [vmem:[%s1139] sm:$0xf]
        %v1141 = vpack.c.bf16 %v1137, %v1137
        %v1142 = vpack.c.bf16 %v1136, %v1136
        %v1143 = vpack.c.bf16 %v1138, %v1138
        %v1145 = vsel %vm285, %v1140, 0
        %v1148 = vsel %vm289, %v1141, 0
        %v1151 = vsel %vm289, %v1142, 0
        %v1154 = vsel %vm289, %v1143, 0
        %1156 = vmatprep.subr.bf16.mxu0 %v1151
        %1157 = vmatpush1.bf16.msra.mxu0 %v1148
        %1158 = vmatprep.subr.bf16.mxu0 0
        %1159 = vmatpush1.bf16.msra.mxu0 0
        %1160 = vmatprep.subr.bf16.mxu0 0
        %1161 = vmatpush1.bf16.msra.mxu0 0
        %1162 = vmatprep.subr.bf16.mxu0 0
        %1163 = vmatpush1.bf16.msra.mxu0 0
        %1164 = vmatprep.subr.bf16.mxu0 0
        %1165 = vmatpush1.bf16.msra.mxu0 0
        %1166 = vmatprep.subr.bf16.mxu0 0
        %1167 = vmatpush1.bf16.msra.mxu0 0
        %1168 = vmatprep.subr.bf16.mxu0 0
        %1169 = vmatpush1.bf16.msra.mxu0 0
        %1170 = vmatprep.subr.bf16.mxu0 0
        %1171 = vmatpush1.bf16.msra.mxu0 0
        %1172 = vmatprep.subr.bf16.mxu0 0
        %1173 = vmatpush1.bf16.msra.mxu0 0
        %1174 = vmatprep.subr.bf16.mxu0 0
        %1175 = vmatpush1.bf16.msra.mxu0 0
        %1176 = vmatprep.subr.bf16.mxu0 0
        %1177 = vmatpush1.bf16.msra.mxu0 0
        %1178 = vmatprep.subr.bf16.mxu0 0
        %1179 = vmatpush1.bf16.msra.mxu0 0
        %1180 = vmatprep.subr.bf16.mxu0 0
        %1181 = vmatpush1.bf16.msra.mxu0 0
        %1182 = vmatprep.subr.bf16.mxu0 0
        %1183 = vmatpush1.bf16.msra.mxu0 0
        %1184 = vmatprep.subr.bf16.mxu0 0
        %1185 = vmatpush1.bf16.msra.mxu0 0
        %1186 = vmatprep.subr.bf16.mxu0 0
        %1187 = vmatpush1.bf16.msra.mxu0 0
        %1188 = vmatprep.mubr.bf16.mxu0 0
        %1189 = vmatmul.mubr.bf16.gmra.mrb[0].mxu0 %v1145
        %v1190 = vpop.f32.mrb[0].mxu0
        %v1191 = vadd.f32 0.0, %v1190
        %v1192 = vpop.f32.mrb[0].mxu0
        %v1193 = vadd.f32 0.0, %v1192
        %v1194 = vpop.f32.mrb[0].mxu0
        %v1195 = vpop.f32.mrb[0].mxu0
        %1196 = vdwg.mxu0
        %1197 = vmatprep.subr.bf16.mxu0 0
        %1198 = vmatpush1.bf16.msra.mxu0 %v1154
        %1199 = vmatprep.subr.bf16.mxu0 0
        %1200 = vmatpush1.bf16.msra.mxu0 0
        %1201 = vmatprep.subr.bf16.mxu0 0
        %1202 = vmatpush1.bf16.msra.mxu0 0
        %1203 = vmatprep.subr.bf16.mxu0 0
        %1204 = vmatpush1.bf16.msra.mxu0 0
        %1205 = vmatprep.subr.bf16.mxu0 0
        %1206 = vmatpush1.bf16.msra.mxu0 0
        %1207 = vmatprep.subr.bf16.mxu0 0
        %1208 = vmatpush1.bf16.msra.mxu0 0
        %1209 = vmatprep.subr.bf16.mxu0 0
        %1210 = vmatpush1.bf16.msra.mxu0 0
        %1211 = vmatprep.subr.bf16.mxu0 0
        %1212 = vmatpush1.bf16.msra.mxu0 0
        %1213 = vmatprep.subr.bf16.mxu0 0
        %1214 = vmatpush1.bf16.msra.mxu0 0
        %1215 = vmatprep.subr.bf16.mxu0 0
        %1216 = vmatpush1.bf16.msra.mxu0 0
        %1217 = vmatprep.subr.bf16.mxu0 0
        %1218 = vmatpush1.bf16.msra.mxu0 0
        %1219 = vmatprep.subr.bf16.mxu0 0
        %1220 = vmatpush1.bf16.msra.mxu0 0
        %1221 = vmatprep.subr.bf16.mxu0 0
        %1222 = vmatpush1.bf16.msra.mxu0 0
        %1223 = vmatprep.subr.bf16.mxu0 0
        %1224 = vmatpush1.bf16.msra.mxu0 0
        %1225 = vmatprep.subr.bf16.mxu0 0
        %1226 = vmatpush1.bf16.msra.mxu0 0
        %1227 = vmatprep.subr.bf16.mxu0 0
        %1228 = vmatpush1.bf16.msra.mxu0 0
        %1229 = vmatprep.mubr.bf16.mxu0 0
        %1230 = vmatmul.mubr.bf16.gmra.mrb[0].mxu0 %v1145
        %v1231 = vpop.f32.mrb[0].mxu0
        %v1232 = vadd.f32 0.0, %v1231
        %v1233 = vpop.f32.mrb[0].mxu0
        %v1234 = vpop.f32.mrb[0].mxu0
        %v1235 = vpop.f32.mrb[0].mxu0
        %1236 = vdwg.mxu0
        %v1237 = vadd.f32 %v1126, %v1191
        %v1238 = vadd.f32 %v1127, %v1193
        %v1239 = vadd.f32 %v1128, %v1232
        %v1240 = vld [vmem:[%s3] sm:$0xff]
        %1242 = vset.pattern.permute.xlu0 0
        %1243 = vperm.xlu0 %1242, %v1240
        %v1244 = vpop.permute.xlu0 %1243
        %v1246 = vadd.f32 %v1237, %v1244
        %v1247 = vadd.f32 %v1238, %v1244
        %v1248 = vadd.f32 %v1239, %v1244
        %v1249 = vmul.f32 %v1246, 0.2
        %v1250 = vmul.f32 %v1247, 0.2
        %v1251 = vmul.f32 %v1248, 0.2
        %v1252 = vmax.f32 %v1246, %v1249
        %v1253 = vmax.f32 %v1247, %v1250
        %v1254 = vmax.f32 %v1248, %v1251
        %v1255 = vld [vmem:[%s5] sm:$0x7]
        %v1257 = vlaneseq
        %v1258 = vshrl.u32 %v1257, 7
        %v1259 = vsub.s32 0, %v1258
        %v1260 = vrot.slane %v1255, %v1259
        %v1261 = vlaneseq
        %v1262 = vshrl.u32 %v1261, 7
        %v1263 = vsub.s32 1, %v1262
        %v1264 = vrot.slane %v1255, %v1263
        %v1265 = vlaneseq
        %v1266 = vshrl.u32 %v1265, 7
        %v1267 = vsub.s32 2, %v1266
        %v1268 = vrot.slane %v1255, %v1267
        %v1272 = vmul.f32 %v1252, %v1260
        %v1273 = vmul.f32 %v1253, %v1264
        %v1274 = vmul.f32 %v1254, %v1268
        %1275 = vrot.lane.b32.xlu0 %v1272, 19
        %v1276 = vpop.permute.xlu0 %1275
        %1277 = vrot.lane.b32.xlu0 %v1273, 19
        %v1278 = vpop.permute.xlu0 %1277
        %1279 = vrot.lane.b32.xlu0 %v1274, 19
        %v1280 = vpop.permute.xlu0 %1279
        %v1281 = vsel %vm262, %v1278, %v1280
        %v1282 = vsel %vm262, %v1276, %v1278
        %v1283 = vsel %vm262, %v1280, %v1276
        %v1284 = vld [vmem:[%s2] sm:$0xf]
        %v1285 = vpack.c.bf16 %v1283, %v1283
        %v1286 = vpack.c.bf16 %v1282, %v1282
        %v1287 = vpack.c.bf16 %v1281, %v1281
        %1288 = vrot.lane.b32.xlu0 %v1272, 18
        %v1289 = vpop.permute.xlu0 %1288
        %1290 = vrot.lane.b32.xlu0 %v1273, 18
        %v1291 = vpop.permute.xlu0 %1290
        %1292 = vrot.lane.b32.xlu0 %v1274, 18
        %v1293 = vpop.permute.xlu0 %1292
        %v1294 = vsel %vm276, %v1291, %v1293
        %v1295 = vsel %vm276, %v1289, %v1291
        %v1296 = vsel %vm276, %v1293, %v1289
        %s1297 = scalar_lea.vmem %s2, 4
        %v1298 = vld [vmem:[%s1297] sm:$0xf]
        %v1299 = vpack.c.bf16 %v1296, %v1296
        %v1300 = vpack.c.bf16 %v1295, %v1295
        %v1301 = vpack.c.bf16 %v1294, %v1294
        %v1303 = vsel %vm285, %v1298, 0
        %v1306 = vsel %vm289, %v1299, 0
        %v1309 = vsel %vm289, %v1300, 0
        %v1312 = vsel %vm289, %v1301, 0
        %1314 = vmatprep.subr.bf16.mxu0 %v1309
        %1315 = vmatpush1.bf16.msra.mxu0 %v1306
        %1316 = vmatprep.subr.bf16.mxu0 0
        %1317 = vmatpush1.bf16.msra.mxu0 0
        %1318 = vmatprep.subr.bf16.mxu0 0
        %1319 = vmatpush1.bf16.msra.mxu0 0
        %1320 = vmatprep.subr.bf16.mxu0 0
        %1321 = vmatpush1.bf16.msra.mxu0 0
        %1322 = vmatprep.subr.bf16.mxu0 0
        %1323 = vmatpush1.bf16.msra.mxu0 0
        %1324 = vmatprep.subr.bf16.mxu0 0
        %1325 = vmatpush1.bf16.msra.mxu0 0
        %1326 = vmatprep.subr.bf16.mxu0 0
        %1327 = vmatpush1.bf16.msra.mxu0 0
        %1328 = vmatprep.subr.bf16.mxu0 0
        %1329 = vmatpush1.bf16.msra.mxu0 0
        %1330 = vmatprep.subr.bf16.mxu0 0
        %1331 = vmatpush1.bf16.msra.mxu0 0
        %1332 = vmatprep.subr.bf16.mxu0 0
        %1333 = vmatpush1.bf16.msra.mxu0 0
        %1334 = vmatprep.subr.bf16.mxu0 0
        %1335 = vmatpush1.bf16.msra.mxu0 0
        %1336 = vmatprep.subr.bf16.mxu0 0
        %1337 = vmatpush1.bf16.msra.mxu0 0
        %1338 = vmatprep.subr.bf16.mxu0 0
        %1339 = vmatpush1.bf16.msra.mxu0 0
        %1340 = vmatprep.subr.bf16.mxu0 0
        %1341 = vmatpush1.bf16.msra.mxu0 0
        %1342 = vmatprep.subr.bf16.mxu0 0
        %1343 = vmatpush1.bf16.msra.mxu0 0
        %1344 = vmatprep.subr.bf16.mxu0 0
        %1345 = vmatpush1.bf16.msra.mxu0 0
        %1346 = vmatprep.mubr.bf16.mxu0 0
        %1347 = vmatmul.mubr.bf16.gmra.mrb[0].mxu0 %v1303
        %v1348 = vpop.f32.mrb[0].mxu0
        %v1349 = vadd.f32 0.0, %v1348
        %v1350 = vpop.f32.mrb[0].mxu0
        %v1351 = vadd.f32 0.0, %v1350
        %v1352 = vpop.f32.mrb[0].mxu0
        %v1353 = vpop.f32.mrb[0].mxu0
        %1354 = vdwg.mxu0
        %1355 = vmatprep.subr.bf16.mxu0 0
        %1356 = vmatpush1.bf16.msra.mxu0 %v1312
        %1357 = vmatprep.subr.bf16.mxu0 0
        %1358 = vmatpush1.bf16.msra.mxu0 0
        %1359 = vmatprep.subr.bf16.mxu0 0
        %1360 = vmatpush1.bf16.msra.mxu0 0
        %1361 = vmatprep.subr.bf16.mxu0 0
        %1362 = vmatpush1.bf16.msra.mxu0 0
        %1363 = vmatprep.subr.bf16.mxu0 0
        %1364 = vmatpush1.bf16.msra.mxu0 0
        %1365 = vmatprep.subr.bf16.mxu0 0
        %1366 = vmatpush1.bf16.msra.mxu0 0
        %1367 = vmatprep.subr.bf16.mxu0 0
        %1368 = vmatpush1.bf16.msra.mxu0 0
        %1369 = vmatprep.subr.bf16.mxu0 0
        %1370 = vmatpush1.bf16.msra.mxu0 0
        %1371 = vmatprep.subr.bf16.mxu0 0
        %1372 = vmatpush1.bf16.msra.mxu0 0
        %1373 = vmatprep.subr.bf16.mxu0 0
        %1374 = vmatpush1.bf16.msra.mxu0 0
        %1375 = vmatprep.subr.bf16.mxu0 0
        %1376 = vmatpush1.bf16.msra.mxu0 0
        %1377 = vmatprep.subr.bf16.mxu0 0
        %1378 = vmatpush1.bf16.msra.mxu0 0
        %1379 = vmatprep.subr.bf16.mxu0 0
        %1380 = vmatpush1.bf16.msra.mxu0 0
        %1381 = vmatprep.subr.bf16.mxu0 0
        %1382 = vmatpush1.bf16.msra.mxu0 0
        %1383 = vmatprep.subr.bf16.mxu0 0
        %1384 = vmatpush1.bf16.msra.mxu0 0
        %1385 = vmatprep.subr.bf16.mxu0 0
        %1386 = vmatpush1.bf16.msra.mxu0 0
        %1387 = vmatprep.mubr.bf16.mxu0 0
        %1388 = vmatmul.mubr.bf16.gmra.mrb[0].mxu0 %v1303
        %v1389 = vpop.f32.mrb[0].mxu0
        %v1390 = vadd.f32 0.0, %v1389
        %v1391 = vpop.f32.mrb[0].mxu0
        %v1392 = vpop.f32.mrb[0].mxu0
        %v1393 = vpop.f32.mrb[0].mxu0
        %1394 = vdwg.mxu0
        %v1396 = vsel %vm285, %v1284, 0
        %v1399 = vsel %vm289, %v1285, 0
        %v1402 = vsel %vm289, %v1286, 0
        %v1405 = vsel %vm289, %v1287, 0
        %1407 = vmatprep.subr.bf16.mxu0 %v1402
        %1408 = vmatpush1.bf16.msra.mxu0 %v1399
        %1409 = vmatprep.subr.bf16.mxu0 0
        %1410 = vmatpush1.bf16.msra.mxu0 0
        %1411 = vmatprep.subr.bf16.mxu0 0
        %1412 = vmatpush1.bf16.msra.mxu0 0
        %1413 = vmatprep.subr.bf16.mxu0 0
        %1414 = vmatpush1.bf16.msra.mxu0 0
        %1415 = vmatprep.subr.bf16.mxu0 0
        %1416 = vmatpush1.bf16.msra.mxu0 0
        %1417 = vmatprep.subr.bf16.mxu0 0
        %1418 = vmatpush1.bf16.msra.mxu0 0
        %1419 = vmatprep.subr.bf16.mxu0 0
        %1420 = vmatpush1.bf16.msra.mxu0 0
        %1421 = vmatprep.subr.bf16.mxu0 0
        %1422 = vmatpush1.bf16.msra.mxu0 0
        %1423 = vmatprep.subr.bf16.mxu0 0
        %1424 = vmatpush1.bf16.msra.mxu0 0
        %1425 = vmatprep.subr.bf16.mxu0 0
        %1426 = vmatpush1.bf16.msra.mxu0 0
        %1427 = vmatprep.subr.bf16.mxu0 0
        %1428 = vmatpush1.bf16.msra.mxu0 0
        %1429 = vmatprep.subr.bf16.mxu0 0
        %1430 = vmatpush1.bf16.msra.mxu0 0
        %1431 = vmatprep.subr.bf16.mxu0 0
        %1432 = vmatpush1.bf16.msra.mxu0 0
        %1433 = vmatprep.subr.bf16.mxu0 0
        %1434 = vmatpush1.bf16.msra.mxu0 0
        %1435 = vmatprep.subr.bf16.mxu0 0
        %1436 = vmatpush1.bf16.msra.mxu0 0
        %1437 = vmatprep.subr.bf16.mxu0 0
        %1438 = vmatpush1.bf16.msra.mxu0 0
        %1439 = vmatprep.mubr.bf16.mxu0 0
        %1440 = vmatmul.mubr.bf16.gmra.mrb[0].mxu0 %v1396
        %v1441 = vpop.f32.mrb[0].mxu0
        %v1442 = vadd.f32 %v1349, %v1441
        %v1443 = vpop.f32.mrb[0].mxu0
        %v1444 = vadd.f32 %v1351, %v1443
        %v1445 = vpop.f32.mrb[0].mxu0
        %v1446 = vpop.f32.mrb[0].mxu0
        %1447 = vdwg.mxu0
        %1448 = vmatprep.subr.bf16.mxu0 0
        %1449 = vmatpush1.bf16.msra.mxu0 %v1405
        %1450 = vmatprep.subr.bf16.mxu0 0
        %1451 = vmatpush1.bf16.msra.mxu0 0
        %1452 = vmatprep.subr.bf16.mxu0 0
        %1453 = vmatpush1.bf16.msra.mxu0 0
        %1454 = vmatprep.subr.bf16.mxu0 0
        %1455 = vmatpush1.bf16.msra.mxu0 0
        %1456 = vmatprep.subr.bf16.mxu0 0
        %1457 = vmatpush1.bf16.msra.mxu0 0
        %1458 = vmatprep.subr.bf16.mxu0 0
        %1459 = vmatpush1.bf16.msra.mxu0 0
        %1460 = vmatprep.subr.bf16.mxu0 0
        %1461 = vmatpush1.bf16.msra.mxu0 0
        %1462 = vmatprep.subr.bf16.mxu0 0
        %1463 = vmatpush1.bf16.msra.mxu0 0
        %1464 = vmatprep.subr.bf16.mxu0 0
        %1465 = vmatpush1.bf16.msra.mxu0 0
        %1466 = vmatprep.subr.bf16.mxu0 0
        %1467 = vmatpush1.bf16.msra.mxu0 0
        %1468 = vmatprep.subr.bf16.mxu0 0
        %1469 = vmatpush1.bf16.msra.mxu0 0
        %1470 = vmatprep.subr.bf16.mxu0 0
        %1471 = vmatpush1.bf16.msra.mxu0 0
        %1472 = vmatprep.subr.bf16.mxu0 0
        %1473 = vmatpush1.bf16.msra.mxu0 0
        %1474 = vmatprep.subr.bf16.mxu0 0
        %1475 = vmatpush1.bf16.msra.mxu0 0
        %1476 = vmatprep.subr.bf16.mxu0 0
        %1477 = vmatpush1.bf16.msra.mxu0 0
        %1478 = vmatprep.subr.bf16.mxu0 0
        %1479 = vmatpush1.bf16.msra.mxu0 0
        %1480 = vmatprep.mubr.bf16.mxu0 0
        %1481 = vmatmul.mubr.bf16.gmra.mrb[0].mxu0 %v1396
        %v1482 = vpop.f32.mrb[0].mxu0
        %v1483 = vadd.f32 %v1390, %v1482
        %v1484 = vpop.f32.mrb[0].mxu0
        %v1485 = vpop.f32.mrb[0].mxu0
        %v1486 = vpop.f32.mrb[0].mxu0
        %1487 = vdwg.mxu0
        %1488 = vrot.lane.b32.xlu0 %v1272, 17
        %v1489 = vpop.permute.xlu0 %1488
        %1490 = vrot.lane.b32.xlu0 %v1273, 17
        %v1491 = vpop.permute.xlu0 %1490
        %1492 = vrot.lane.b32.xlu0 %v1274, 17
        %v1493 = vpop.permute.xlu0 %1492
        %v1494 = vsel %vm479, %v1491, %v1493
        %v1495 = vsel %vm479, %v1489, %v1491
        %v1496 = vsel %vm479, %v1493, %v1489
        %s1497 = scalar_lea.vmem %s2, 8
        %v1498 = vld [vmem:[%s1497] sm:$0xf]
        %v1499 = vpack.c.bf16 %v1496, %v1496
        %v1500 = vpack.c.bf16 %v1495, %v1495
        %v1501 = vpack.c.bf16 %v1494, %v1494
        %v1503 = vsel %vm285, %v1498, 0
        %v1506 = vsel %vm289, %v1499, 0
        %v1509 = vsel %vm289, %v1500, 0
        %v1512 = vsel %vm289, %v1501, 0
        %1514 = vmatprep.subr.bf16.mxu0 %v1509
        %1515 = vmatpush1.bf16.msra.mxu0 %v1506
        %1516 = vmatprep.subr.bf16.mxu0 0
        %1517 = vmatpush1.bf16.msra.mxu0 0
        %1518 = vmatprep.subr.bf16.mxu0 0
        %1519 = vmatpush1.bf16.msra.mxu0 0
        %1520 = vmatprep.subr.bf16.mxu0 0
        %1521 = vmatpush1.bf16.msra.mxu0 0
        %1522 = vmatprep.subr.bf16.mxu0 0
        %1523 = vmatpush1.bf16.msra.mxu0 0
        %1524 = vmatprep.subr.bf16.mxu0 0
        %1525 = vmatpush1.bf16.msra.mxu0 0
        %1526 = vmatprep.subr.bf16.mxu0 0
        %1527 = vmatpush1.bf16.msra.mxu0 0
        %1528 = vmatprep.subr.bf16.mxu0 0
        %1529 = vmatpush1.bf16.msra.mxu0 0
        %1530 = vmatprep.subr.bf16.mxu0 0
        %1531 = vmatpush1.bf16.msra.mxu0 0
        %1532 = vmatprep.subr.bf16.mxu0 0
        %1533 = vmatpush1.bf16.msra.mxu0 0
        %1534 = vmatprep.subr.bf16.mxu0 0
        %1535 = vmatpush1.bf16.msra.mxu0 0
        %1536 = vmatprep.subr.bf16.mxu0 0
        %1537 = vmatpush1.bf16.msra.mxu0 0
        %1538 = vmatprep.subr.bf16.mxu0 0
        %1539 = vmatpush1.bf16.msra.mxu0 0
        %1540 = vmatprep.subr.bf16.mxu0 0
        %1541 = vmatpush1.bf16.msra.mxu0 0
        %1542 = vmatprep.subr.bf16.mxu0 0
        %1543 = vmatpush1.bf16.msra.mxu0 0
        %1544 = vmatprep.subr.bf16.mxu0 0
        %1545 = vmatpush1.bf16.msra.mxu0 0
        %1546 = vmatprep.mubr.bf16.mxu0 0
        %1547 = vmatmul.mubr.bf16.gmra.mrb[0].mxu0 %v1503
        %v1548 = vpop.f32.mrb[0].mxu0
        %v1549 = vadd.f32 0.0, %v1548
        %v1550 = vpop.f32.mrb[0].mxu0
        %v1551 = vadd.f32 0.0, %v1550
        %v1552 = vpop.f32.mrb[0].mxu0
        %v1553 = vpop.f32.mrb[0].mxu0
        %1554 = vdwg.mxu0
        %1555 = vmatprep.subr.bf16.mxu0 0
        %1556 = vmatpush1.bf16.msra.mxu0 %v1512
        %1557 = vmatprep.subr.bf16.mxu0 0
        %1558 = vmatpush1.bf16.msra.mxu0 0
        %1559 = vmatprep.subr.bf16.mxu0 0
        %1560 = vmatpush1.bf16.msra.mxu0 0
        %1561 = vmatprep.subr.bf16.mxu0 0
        %1562 = vmatpush1.bf16.msra.mxu0 0
        %1563 = vmatprep.subr.bf16.mxu0 0
        %1564 = vmatpush1.bf16.msra.mxu0 0
        %1565 = vmatprep.subr.bf16.mxu0 0
        %1566 = vmatpush1.bf16.msra.mxu0 0
        %1567 = vmatprep.subr.bf16.mxu0 0
        %1568 = vmatpush1.bf16.msra.mxu0 0
        %1569 = vmatprep.subr.bf16.mxu0 0
        %1570 = vmatpush1.bf16.msra.mxu0 0
        %1571 = vmatprep.subr.bf16.mxu0 0
        %1572 = vmatpush1.bf16.msra.mxu0 0
        %1573 = vmatprep.subr.bf16.mxu0 0
        %1574 = vmatpush1.bf16.msra.mxu0 0
        %1575 = vmatprep.subr.bf16.mxu0 0
        %1576 = vmatpush1.bf16.msra.mxu0 0
        %1577 = vmatprep.subr.bf16.mxu0 0
        %1578 = vmatpush1.bf16.msra.mxu0 0
        %1579 = vmatprep.subr.bf16.mxu0 0
        %1580 = vmatpush1.bf16.msra.mxu0 0
        %1581 = vmatprep.subr.bf16.mxu0 0
        %1582 = vmatpush1.bf16.msra.mxu0 0
        %1583 = vmatprep.subr.bf16.mxu0 0
        %1584 = vmatpush1.bf16.msra.mxu0 0
        %1585 = vmatprep.subr.bf16.mxu0 0
        %1586 = vmatpush1.bf16.msra.mxu0 0
        %1587 = vmatprep.mubr.bf16.mxu0 0
        %1588 = vmatmul.mubr.bf16.gmra.mrb[0].mxu0 %v1503
        %v1589 = vpop.f32.mrb[0].mxu0
        %v1590 = vadd.f32 0.0, %v1589
        %v1591 = vpop.f32.mrb[0].mxu0
        %v1592 = vpop.f32.mrb[0].mxu0
        %v1593 = vpop.f32.mrb[0].mxu0
        %1594 = vdwg.mxu0
        %v1595 = vadd.f32 %v1442, %v1549
        %v1596 = vadd.f32 %v1444, %v1551
        %v1597 = vadd.f32 %v1483, %v1590
        %1598 = vrot.lane.b32.xlu0 %v1272, 1
        %v1599 = vpop.permute.xlu0 %1598
        %1600 = vrot.lane.b32.xlu0 %v1273, 1
        %v1601 = vpop.permute.xlu0 %1600
        %1602 = vrot.lane.b32.xlu0 %v1274, 1
        %v1603 = vpop.permute.xlu0 %1602
        %v1604 = vsel %vm590, %v1601, %v1603
        %v1605 = vsel %vm590, %v1599, %v1601
        %v1606 = vsel %vm590, %v1603, %v1599
        %s1607 = scalar_lea.vmem %s2, 12
        %v1608 = vld [vmem:[%s1607] sm:$0xf]
        %v1609 = vpack.c.bf16 %v1606, %v1606
        %v1610 = vpack.c.bf16 %v1605, %v1605
        %v1611 = vpack.c.bf16 %v1604, %v1604
        %v1613 = vsel %vm285, %v1608, 0
        %v1616 = vsel %vm289, %v1609, 0
        %v1619 = vsel %vm289, %v1610, 0
        %v1622 = vsel %vm289, %v1611, 0
        %1624 = vmatprep.subr.bf16.mxu0 %v1619
        %1625 = vmatpush1.bf16.msra.mxu0 %v1616
        %1626 = vmatprep.subr.bf16.mxu0 0
        %1627 = vmatpush1.bf16.msra.mxu0 0
        %1628 = vmatprep.subr.bf16.mxu0 0
        %1629 = vmatpush1.bf16.msra.mxu0 0
        %1630 = vmatprep.subr.bf16.mxu0 0
        %1631 = vmatpush1.bf16.msra.mxu0 0
        %1632 = vmatprep.subr.bf16.mxu0 0
        %1633 = vmatpush1.bf16.msra.mxu0 0
        %1634 = vmatprep.subr.bf16.mxu0 0
        %1635 = vmatpush1.bf16.msra.mxu0 0
        %1636 = vmatprep.subr.bf16.mxu0 0
        %1637 = vmatpush1.bf16.msra.mxu0 0
        %1638 = vmatprep.subr.bf16.mxu0 0
        %1639 = vmatpush1.bf16.msra.mxu0 0
        %1640 = vmatprep.subr.bf16.mxu0 0
        %1641 = vmatpush1.bf16.msra.mxu0 0
        %1642 = vmatprep.subr.bf16.mxu0 0
        %1643 = vmatpush1.bf16.msra.mxu0 0
        %1644 = vmatprep.subr.bf16.mxu0 0
        %1645 = vmatpush1.bf16.msra.mxu0 0
        %1646 = vmatprep.subr.bf16.mxu0 0
        %1647 = vmatpush1.bf16.msra.mxu0 0
        %1648 = vmatprep.subr.bf16.mxu0 0
        %1649 = vmatpush1.bf16.msra.mxu0 0
        %1650 = vmatprep.subr.bf16.mxu0 0
        %1651 = vmatpush1.bf16.msra.mxu0 0
        %1652 = vmatprep.subr.bf16.mxu0 0
        %1653 = vmatpush1.bf16.msra.mxu0 0
        %1654 = vmatprep.subr.bf16.mxu0 0
        %1655 = vmatpush1.bf16.msra.mxu0 0
        %1656 = vmatprep.mubr.bf16.mxu0 0
        %1657 = vmatmul.mubr.bf16.gmra.mrb[0].mxu0 %v1613
        %v1658 = vpop.f32.mrb[0].mxu0
        %v1659 = vadd.f32 0.0, %v1658
        %v1660 = vpop.f32.mrb[0].mxu0
        %v1661 = vadd.f32 0.0, %v1660
        %v1662 = vpop.f32.mrb[0].mxu0
        %v1663 = vpop.f32.mrb[0].mxu0
        %1664 = vdwg.mxu0
        %1665 = vmatprep.subr.bf16.mxu0 0
        %1666 = vmatpush1.bf16.msra.mxu0 %v1622
        %1667 = vmatprep.subr.bf16.mxu0 0
        %1668 = vmatpush1.bf16.msra.mxu0 0
        %1669 = vmatprep.subr.bf16.mxu0 0
        %1670 = vmatpush1.bf16.msra.mxu0 0
        %1671 = vmatprep.subr.bf16.mxu0 0
        %1672 = vmatpush1.bf16.msra.mxu0 0
        %1673 = vmatprep.subr.bf16.mxu0 0
        %1674 = vmatpush1.bf16.msra.mxu0 0
        %1675 = vmatprep.subr.bf16.mxu0 0
        %1676 = vmatpush1.bf16.msra.mxu0 0
        %1677 = vmatprep.subr.bf16.mxu0 0
        %1678 = vmatpush1.bf16.msra.mxu0 0
        %1679 = vmatprep.subr.bf16.mxu0 0
        %1680 = vmatpush1.bf16.msra.mxu0 0
        %1681 = vmatprep.subr.bf16.mxu0 0
        %1682 = vmatpush1.bf16.msra.mxu0 0
        %1683 = vmatprep.subr.bf16.mxu0 0
        %1684 = vmatpush1.bf16.msra.mxu0 0
        %1685 = vmatprep.subr.bf16.mxu0 0
        %1686 = vmatpush1.bf16.msra.mxu0 0
        %1687 = vmatprep.subr.bf16.mxu0 0
        %1688 = vmatpush1.bf16.msra.mxu0 0
        %1689 = vmatprep.subr.bf16.mxu0 0
        %1690 = vmatpush1.bf16.msra.mxu0 0
        %1691 = vmatprep.subr.bf16.mxu0 0
        %1692 = vmatpush1.bf16.msra.mxu0 0
        %1693 = vmatprep.subr.bf16.mxu0 0
        %1694 = vmatpush1.bf16.msra.mxu0 0
        %1695 = vmatprep.subr.bf16.mxu0 0
        %1696 = vmatpush1.bf16.msra.mxu0 0
        %1697 = vmatprep.mubr.bf16.mxu0 0
        %1698 = vmatmul.mubr.bf16.gmra.mrb[0].mxu0 %v1613
        %v1699 = vpop.f32.mrb[0].mxu0
        %v1700 = vadd.f32 0.0, %v1699
        %v1701 = vpop.f32.mrb[0].mxu0
        %v1702 = vpop.f32.mrb[0].mxu0
        %v1703 = vpop.f32.mrb[0].mxu0
        %1704 = vdwg.mxu0
        %v1705 = vadd.f32 %v1595, %v1659
        %v1706 = vadd.f32 %v1596, %v1661
        %v1707 = vadd.f32 %v1597, %v1700
        %s1708 = scalar_lea.vmem %s2, 16
        %v1709 = vld [vmem:[%s1708] sm:$0xf]
        %v1710 = vpack.c.bf16 %v1272, %v1272
        %v1711 = vpack.c.bf16 %v1273, %v1273
        %v1712 = vpack.c.bf16 %v1274, %v1274
        %v1714 = vsel %vm285, %v1709, 0
        %v1717 = vsel %vm289, %v1710, 0
        %v1720 = vsel %vm289, %v1711, 0
        %v1723 = vsel %vm289, %v1712, 0
        %1725 = vmatprep.subr.bf16.mxu0 %v1720
        %1726 = vmatpush1.bf16.msra.mxu0 %v1717
        %1727 = vmatprep.subr.bf16.mxu0 0
        %1728 = vmatpush1.bf16.msra.mxu0 0
        %1729 = vmatprep.subr.bf16.mxu0 0
        %1730 = vmatpush1.bf16.msra.mxu0 0
        %1731 = vmatprep.subr.bf16.mxu0 0
        %1732 = vmatpush1.bf16.msra.mxu0 0
        %1733 = vmatprep.subr.bf16.mxu0 0
        %1734 = vmatpush1.bf16.msra.mxu0 0
        %1735 = vmatprep.subr.bf16.mxu0 0
        %1736 = vmatpush1.bf16.msra.mxu0 0
        %1737 = vmatprep.subr.bf16.mxu0 0
        %1738 = vmatpush1.bf16.msra.mxu0 0
        %1739 = vmatprep.subr.bf16.mxu0 0
        %1740 = vmatpush1.bf16.msra.mxu0 0
        %1741 = vmatprep.subr.bf16.mxu0 0
        %1742 = vmatpush1.bf16.msra.mxu0 0
        %1743 = vmatprep.subr.bf16.mxu0 0
        %1744 = vmatpush1.bf16.msra.mxu0 0
        %1745 = vmatprep.subr.bf16.mxu0 0
        %1746 = vmatpush1.bf16.msra.mxu0 0
        %1747 = vmatprep.subr.bf16.mxu0 0
        %1748 = vmatpush1.bf16.msra.mxu0 0
        %1749 = vmatprep.subr.bf16.mxu0 0
        %1750 = vmatpush1.bf16.msra.mxu0 0
        %1751 = vmatprep.subr.bf16.mxu0 0
        %1752 = vmatpush1.bf16.msra.mxu0 0
        %1753 = vmatprep.subr.bf16.mxu0 0
        %1754 = vmatpush1.bf16.msra.mxu0 0
        %1755 = vmatprep.subr.bf16.mxu0 0
        %1756 = vmatpush1.bf16.msra.mxu0 0
        %1757 = vmatprep.mubr.bf16.mxu0 0
        %1758 = vmatmul.mubr.bf16.gmra.mrb[0].mxu0 %v1714
        %v1759 = vpop.f32.mrb[0].mxu0
        %v1760 = vadd.f32 0.0, %v1759
        %v1761 = vpop.f32.mrb[0].mxu0
        %v1762 = vadd.f32 0.0, %v1761
        %v1763 = vpop.f32.mrb[0].mxu0
        %v1764 = vpop.f32.mrb[0].mxu0
        %1765 = vdwg.mxu0
        %1766 = vmatprep.subr.bf16.mxu0 0
        %1767 = vmatpush1.bf16.msra.mxu0 %v1723
        %1768 = vmatprep.subr.bf16.mxu0 0
        %1769 = vmatpush1.bf16.msra.mxu0 0
        %1770 = vmatprep.subr.bf16.mxu0 0
        %1771 = vmatpush1.bf16.msra.mxu0 0
        %1772 = vmatprep.subr.bf16.mxu0 0
        %1773 = vmatpush1.bf16.msra.mxu0 0
        %1774 = vmatprep.subr.bf16.mxu0 0
        %1775 = vmatpush1.bf16.msra.mxu0 0
        %1776 = vmatprep.subr.bf16.mxu0 0
        %1777 = vmatpush1.bf16.msra.mxu0 0
        %1778 = vmatprep.subr.bf16.mxu0 0
        %1779 = vmatpush1.bf16.msra.mxu0 0
        %1780 = vmatprep.subr.bf16.mxu0 0
        %1781 = vmatpush1.bf16.msra.mxu0 0
        %1782 = vmatprep.subr.bf16.mxu0 0
        %1783 = vmatpush1.bf16.msra.mxu0 0
        %1784 = vmatprep.subr.bf16.mxu0 0
        %1785 = vmatpush1.bf16.msra.mxu0 0
        %1786 = vmatprep.subr.bf16.mxu0 0
        %1787 = vmatpush1.bf16.msra.mxu0 0
        %1788 = vmatprep.subr.bf16.mxu0 0
        %1789 = vmatpush1.bf16.msra.mxu0 0
        %1790 = vmatprep.subr.bf16.mxu0 0
        %1791 = vmatpush1.bf16.msra.mxu0 0
        %1792 = vmatprep.subr.bf16.mxu0 0
        %1793 = vmatpush1.bf16.msra.mxu0 0
        %1794 = vmatprep.subr.bf16.mxu0 0
        %1795 = vmatpush1.bf16.msra.mxu0 0
        %1796 = vmatprep.subr.bf16.mxu0 0
        %1797 = vmatpush1.bf16.msra.mxu0 0
        %1798 = vmatprep.mubr.bf16.mxu0 0
        %1799 = vmatmul.mubr.bf16.gmra.mrb[0].mxu0 %v1714
        %v1800 = vpop.f32.mrb[0].mxu0
        %v1801 = vadd.f32 0.0, %v1800
        %v1802 = vpop.f32.mrb[0].mxu0
        %v1803 = vpop.f32.mrb[0].mxu0
        %v1804 = vpop.f32.mrb[0].mxu0
        %1805 = vdwg.mxu0
        %v1806 = vadd.f32 %v1705, %v1760
        %v1807 = vadd.f32 %v1706, %v1762
        %v1808 = vadd.f32 %v1707, %v1801
        %1809 = vrot.lane.b32.xlu0 %v1272, 127
        %v1810 = vpop.permute.xlu0 %1809
        %1811 = vrot.lane.b32.xlu0 %v1273, 127
        %v1812 = vpop.permute.xlu0 %1811
        %1813 = vrot.lane.b32.xlu0 %v1274, 127
        %v1814 = vpop.permute.xlu0 %1813
        %v1815 = vsel %vm802, %v1812, %v1814
        %v1816 = vsel %vm802, %v1810, %v1812
        %v1817 = vsel %vm802, %v1814, %v1810
        %s1818 = scalar_lea.vmem %s2, 20
        %v1819 = vld [vmem:[%s1818] sm:$0xf]
        %v1820 = vpack.c.bf16 %v1816, %v1816
        %v1821 = vpack.c.bf16 %v1815, %v1815
        %v1822 = vpack.c.bf16 %v1817, %v1817
        %v1824 = vsel %vm285, %v1819, 0
        %v1827 = vsel %vm289, %v1820, 0
        %v1830 = vsel %vm289, %v1821, 0
        %v1833 = vsel %vm289, %v1822, 0
        %1835 = vmatprep.subr.bf16.mxu0 %v1830
        %1836 = vmatpush1.bf16.msra.mxu0 %v1827
        %1837 = vmatprep.subr.bf16.mxu0 0
        %1838 = vmatpush1.bf16.msra.mxu0 0
        %1839 = vmatprep.subr.bf16.mxu0 0
        %1840 = vmatpush1.bf16.msra.mxu0 0
        %1841 = vmatprep.subr.bf16.mxu0 0
        %1842 = vmatpush1.bf16.msra.mxu0 0
        %1843 = vmatprep.subr.bf16.mxu0 0
        %1844 = vmatpush1.bf16.msra.mxu0 0
        %1845 = vmatprep.subr.bf16.mxu0 0
        %1846 = vmatpush1.bf16.msra.mxu0 0
        %1847 = vmatprep.subr.bf16.mxu0 0
        %1848 = vmatpush1.bf16.msra.mxu0 0
        %1849 = vmatprep.subr.bf16.mxu0 0
        %1850 = vmatpush1.bf16.msra.mxu0 0
        %1851 = vmatprep.subr.bf16.mxu0 0
        %1852 = vmatpush1.bf16.msra.mxu0 0
        %1853 = vmatprep.subr.bf16.mxu0 0
        %1854 = vmatpush1.bf16.msra.mxu0 0
        %1855 = vmatprep.subr.bf16.mxu0 0
        %1856 = vmatpush1.bf16.msra.mxu0 0
        %1857 = vmatprep.subr.bf16.mxu0 0
        %1858 = vmatpush1.bf16.msra.mxu0 0
        %1859 = vmatprep.subr.bf16.mxu0 0
        %1860 = vmatpush1.bf16.msra.mxu0 0
        %1861 = vmatprep.subr.bf16.mxu0 0
        %1862 = vmatpush1.bf16.msra.mxu0 0
        %1863 = vmatprep.subr.bf16.mxu0 0
        %1864 = vmatpush1.bf16.msra.mxu0 0
        %1865 = vmatprep.subr.bf16.mxu0 0
        %1866 = vmatpush1.bf16.msra.mxu0 0
        %1867 = vmatprep.mubr.bf16.mxu0 0
        %1868 = vmatmul.mubr.bf16.gmra.mrb[0].mxu0 %v1824
        %v1869 = vpop.f32.mrb[0].mxu0
        %v1870 = vadd.f32 0.0, %v1869
        %v1871 = vpop.f32.mrb[0].mxu0
        %v1872 = vadd.f32 0.0, %v1871
        %v1873 = vpop.f32.mrb[0].mxu0
        %v1874 = vpop.f32.mrb[0].mxu0
        %1875 = vdwg.mxu0
        %1876 = vmatprep.subr.bf16.mxu0 0
        %1877 = vmatpush1.bf16.msra.mxu0 %v1833
        %1878 = vmatprep.subr.bf16.mxu0 0
        %1879 = vmatpush1.bf16.msra.mxu0 0
        %1880 = vmatprep.subr.bf16.mxu0 0
        %1881 = vmatpush1.bf16.msra.mxu0 0
        %1882 = vmatprep.subr.bf16.mxu0 0
        %1883 = vmatpush1.bf16.msra.mxu0 0
        %1884 = vmatprep.subr.bf16.mxu0 0
        %1885 = vmatpush1.bf16.msra.mxu0 0
        %1886 = vmatprep.subr.bf16.mxu0 0
        %1887 = vmatpush1.bf16.msra.mxu0 0
        %1888 = vmatprep.subr.bf16.mxu0 0
        %1889 = vmatpush1.bf16.msra.mxu0 0
        %1890 = vmatprep.subr.bf16.mxu0 0
        %1891 = vmatpush1.bf16.msra.mxu0 0
        %1892 = vmatprep.subr.bf16.mxu0 0
        %1893 = vmatpush1.bf16.msra.mxu0 0
        %1894 = vmatprep.subr.bf16.mxu0 0
        %1895 = vmatpush1.bf16.msra.mxu0 0
        %1896 = vmatprep.subr.bf16.mxu0 0
        %1897 = vmatpush1.bf16.msra.mxu0 0
        %1898 = vmatprep.subr.bf16.mxu0 0
        %1899 = vmatpush1.bf16.msra.mxu0 0
        %1900 = vmatprep.subr.bf16.mxu0 0
        %1901 = vmatpush1.bf16.msra.mxu0 0
        %1902 = vmatprep.subr.bf16.mxu0 0
        %1903 = vmatpush1.bf16.msra.mxu0 0
        %1904 = vmatprep.subr.bf16.mxu0 0
        %1905 = vmatpush1.bf16.msra.mxu0 0
        %1906 = vmatprep.subr.bf16.mxu0 0
        %1907 = vmatpush1.bf16.msra.mxu0 0
        %1908 = vmatprep.mubr.bf16.mxu0 0
        %1909 = vmatmul.mubr.bf16.gmra.mrb[0].mxu0 %v1824
        %v1910 = vpop.f32.mrb[0].mxu0
        %v1911 = vadd.f32 0.0, %v1910
        %v1912 = vpop.f32.mrb[0].mxu0
        %v1913 = vpop.f32.mrb[0].mxu0
        %v1914 = vpop.f32.mrb[0].mxu0
        %1915 = vdwg.mxu0
        %v1916 = vadd.f32 %v1806, %v1870
        %v1917 = vadd.f32 %v1807, %v1872
        %v1918 = vadd.f32 %v1808, %v1911
        %1919 = vrot.lane.b32.xlu0 %v1272, 111
        %v1920 = vpop.permute.xlu0 %1919
        %1921 = vrot.lane.b32.xlu0 %v1273, 111
        %v1922 = vpop.permute.xlu0 %1921
        %1923 = vrot.lane.b32.xlu0 %v1274, 111
        %v1924 = vpop.permute.xlu0 %1923
        %v1925 = vsel %vm913, %v1922, %v1924
        %v1926 = vsel %vm913, %v1920, %v1922
        %v1927 = vsel %vm913, %v1924, %v1920
        %s1928 = scalar_lea.vmem %s2, 24
        %v1929 = vld [vmem:[%s1928] sm:$0xf]
        %v1930 = vpack.c.bf16 %v1926, %v1926
        %v1931 = vpack.c.bf16 %v1925, %v1925
        %v1932 = vpack.c.bf16 %v1927, %v1927
        %v1934 = vsel %vm285, %v1929, 0
        %v1937 = vsel %vm289, %v1930, 0
        %v1940 = vsel %vm289, %v1931, 0
        %v1943 = vsel %vm289, %v1932, 0
        %1945 = vmatprep.subr.bf16.mxu0 %v1940
        %1946 = vmatpush1.bf16.msra.mxu0 %v1937
        %1947 = vmatprep.subr.bf16.mxu0 0
        %1948 = vmatpush1.bf16.msra.mxu0 0
        %1949 = vmatprep.subr.bf16.mxu0 0
        %1950 = vmatpush1.bf16.msra.mxu0 0
        %1951 = vmatprep.subr.bf16.mxu0 0
        %1952 = vmatpush1.bf16.msra.mxu0 0
        %1953 = vmatprep.subr.bf16.mxu0 0
        %1954 = vmatpush1.bf16.msra.mxu0 0
        %1955 = vmatprep.subr.bf16.mxu0 0
        %1956 = vmatpush1.bf16.msra.mxu0 0
        %1957 = vmatprep.subr.bf16.mxu0 0
        %1958 = vmatpush1.bf16.msra.mxu0 0
        %1959 = vmatprep.subr.bf16.mxu0 0
        %1960 = vmatpush1.bf16.msra.mxu0 0
        %1961 = vmatprep.subr.bf16.mxu0 0
        %1962 = vmatpush1.bf16.msra.mxu0 0
        %1963 = vmatprep.subr.bf16.mxu0 0
        %1964 = vmatpush1.bf16.msra.mxu0 0
        %1965 = vmatprep.subr.bf16.mxu0 0
        %1966 = vmatpush1.bf16.msra.mxu0 0
        %1967 = vmatprep.subr.bf16.mxu0 0
        %1968 = vmatpush1.bf16.msra.mxu0 0
        %1969 = vmatprep.subr.bf16.mxu0 0
        %1970 = vmatpush1.bf16.msra.mxu0 0
        %1971 = vmatprep.subr.bf16.mxu0 0
        %1972 = vmatpush1.bf16.msra.mxu0 0
        %1973 = vmatprep.subr.bf16.mxu0 0
        %1974 = vmatpush1.bf16.msra.mxu0 0
        %1975 = vmatprep.subr.bf16.mxu0 0
        %1976 = vmatpush1.bf16.msra.mxu0 0
        %1977 = vmatprep.mubr.bf16.mxu0 0
        %1978 = vmatmul.mubr.bf16.gmra.mrb[0].mxu0 %v1934
        %v1979 = vpop.f32.mrb[0].mxu0
        %v1980 = vadd.f32 0.0, %v1979
        %v1981 = vpop.f32.mrb[0].mxu0
        %v1982 = vadd.f32 0.0, %v1981
        %v1983 = vpop.f32.mrb[0].mxu0
        %v1984 = vpop.f32.mrb[0].mxu0
        %1985 = vdwg.mxu0
        %1986 = vmatprep.subr.bf16.mxu0 0
        %1987 = vmatpush1.bf16.msra.mxu0 %v1943
        %1988 = vmatprep.subr.bf16.mxu0 0
        %1989 = vmatpush1.bf16.msra.mxu0 0
        %1990 = vmatprep.subr.bf16.mxu0 0
        %1991 = vmatpush1.bf16.msra.mxu0 0
        %1992 = vmatprep.subr.bf16.mxu0 0
        %1993 = vmatpush1.bf16.msra.mxu0 0
        %1994 = vmatprep.subr.bf16.mxu0 0
        %1995 = vmatpush1.bf16.msra.mxu0 0
        %1996 = vmatprep.subr.bf16.mxu0 0
        %1997 = vmatpush1.bf16.msra.mxu0 0
        %1998 = vmatprep.subr.bf16.mxu0 0
        %1999 = vmatpush1.bf16.msra.mxu0 0
        %2000 = vmatprep.subr.bf16.mxu0 0
        %2001 = vmatpush1.bf16.msra.mxu0 0
        %2002 = vmatprep.subr.bf16.mxu0 0
        %2003 = vmatpush1.bf16.msra.mxu0 0
        %2004 = vmatprep.subr.bf16.mxu0 0
        %2005 = vmatpush1.bf16.msra.mxu0 0
        %2006 = vmatprep.subr.bf16.mxu0 0
        %2007 = vmatpush1.bf16.msra.mxu0 0
        %2008 = vmatprep.subr.bf16.mxu0 0
        %2009 = vmatpush1.bf16.msra.mxu0 0
        %2010 = vmatprep.subr.bf16.mxu0 0
        %2011 = vmatpush1.bf16.msra.mxu0 0
        %2012 = vmatprep.subr.bf16.mxu0 0
        %2013 = vmatpush1.bf16.msra.mxu0 0
        %2014 = vmatprep.subr.bf16.mxu0 0
        %2015 = vmatpush1.bf16.msra.mxu0 0
        %2016 = vmatprep.subr.bf16.mxu0 0
        %2017 = vmatpush1.bf16.msra.mxu0 0
        %2018 = vmatprep.mubr.bf16.mxu0 0
        %2019 = vmatmul.mubr.bf16.gmra.mrb[0].mxu0 %v1934
        %v2020 = vpop.f32.mrb[0].mxu0
        %v2021 = vadd.f32 0.0, %v2020
        %v2022 = vpop.f32.mrb[0].mxu0
        %v2023 = vpop.f32.mrb[0].mxu0
        %v2024 = vpop.f32.mrb[0].mxu0
        %2025 = vdwg.mxu0
        %v2026 = vadd.f32 %v1916, %v1980
        %v2027 = vadd.f32 %v1917, %v1982
        %v2028 = vadd.f32 %v1918, %v2021
        %2029 = vrot.lane.b32.xlu0 %v1272, 110
        %v2030 = vpop.permute.xlu0 %2029
        %2031 = vrot.lane.b32.xlu0 %v1273, 110
        %v2032 = vpop.permute.xlu0 %2031
        %2033 = vrot.lane.b32.xlu0 %v1274, 110
        %v2034 = vpop.permute.xlu0 %2033
        %v2035 = vsel %vm1024, %v2032, %v2034
        %v2036 = vsel %vm1024, %v2030, %v2032
        %v2037 = vsel %vm1024, %v2034, %v2030
        %s2038 = scalar_lea.vmem %s2, 28
        %v2039 = vld [vmem:[%s2038] sm:$0xf]
        %v2040 = vpack.c.bf16 %v2036, %v2036
        %v2041 = vpack.c.bf16 %v2035, %v2035
        %v2042 = vpack.c.bf16 %v2037, %v2037
        %v2044 = vsel %vm285, %v2039, 0
        %v2047 = vsel %vm289, %v2040, 0
        %v2050 = vsel %vm289, %v2041, 0
        %v2053 = vsel %vm289, %v2042, 0
        %2055 = vmatprep.subr.bf16.mxu0 %v2050
        %2056 = vmatpush1.bf16.msra.mxu0 %v2047
        %2057 = vmatprep.subr.bf16.mxu0 0
        %2058 = vmatpush1.bf16.msra.mxu0 0
        %2059 = vmatprep.subr.bf16.mxu0 0
        %2060 = vmatpush1.bf16.msra.mxu0 0
        %2061 = vmatprep.subr.bf16.mxu0 0
        %2062 = vmatpush1.bf16.msra.mxu0 0
        %2063 = vmatprep.subr.bf16.mxu0 0
        %2064 = vmatpush1.bf16.msra.mxu0 0
        %2065 = vmatprep.subr.bf16.mxu0 0
        %2066 = vmatpush1.bf16.msra.mxu0 0
        %2067 = vmatprep.subr.bf16.mxu0 0
        %2068 = vmatpush1.bf16.msra.mxu0 0
        %2069 = vmatprep.subr.bf16.mxu0 0
        %2070 = vmatpush1.bf16.msra.mxu0 0
        %2071 = vmatprep.subr.bf16.mxu0 0
        %2072 = vmatpush1.bf16.msra.mxu0 0
        %2073 = vmatprep.subr.bf16.mxu0 0
        %2074 = vmatpush1.bf16.msra.mxu0 0
        %2075 = vmatprep.subr.bf16.mxu0 0
        %2076 = vmatpush1.bf16.msra.mxu0 0
        %2077 = vmatprep.subr.bf16.mxu0 0
        %2078 = vmatpush1.bf16.msra.mxu0 0
        %2079 = vmatprep.subr.bf16.mxu0 0
        %2080 = vmatpush1.bf16.msra.mxu0 0
        %2081 = vmatprep.subr.bf16.mxu0 0
        %2082 = vmatpush1.bf16.msra.mxu0 0
        %2083 = vmatprep.subr.bf16.mxu0 0
        %2084 = vmatpush1.bf16.msra.mxu0 0
        %2085 = vmatprep.subr.bf16.mxu0 0
        %2086 = vmatpush1.bf16.msra.mxu0 0
        %2087 = vmatprep.mubr.bf16.mxu0 0
        %2088 = vmatmul.mubr.bf16.gmra.mrb[0].mxu0 %v2044
        %v2089 = vpop.f32.mrb[0].mxu0
        %v2090 = vadd.f32 0.0, %v2089
        %v2091 = vpop.f32.mrb[0].mxu0
        %v2092 = vadd.f32 0.0, %v2091
        %v2093 = vpop.f32.mrb[0].mxu0
        %v2094 = vpop.f32.mrb[0].mxu0
        %2095 = vdwg.mxu0
        %2096 = vmatprep.subr.bf16.mxu0 0
        %2097 = vmatpush1.bf16.msra.mxu0 %v2053
        %2098 = vmatprep.subr.bf16.mxu0 0
        %2099 = vmatpush1.bf16.msra.mxu0 0
        %2100 = vmatprep.subr.bf16.mxu0 0
        %2101 = vmatpush1.bf16.msra.mxu0 0
        %2102 = vmatprep.subr.bf16.mxu0 0
        %2103 = vmatpush1.bf16.msra.mxu0 0
        %2104 = vmatprep.subr.bf16.mxu0 0
        %2105 = vmatpush1.bf16.msra.mxu0 0
        %2106 = vmatprep.subr.bf16.mxu0 0
        %2107 = vmatpush1.bf16.msra.mxu0 0
        %2108 = vmatprep.subr.bf16.mxu0 0
        %2109 = vmatpush1.bf16.msra.mxu0 0
        %2110 = vmatprep.subr.bf16.mxu0 0
        %2111 = vmatpush1.bf16.msra.mxu0 0
        %2112 = vmatprep.subr.bf16.mxu0 0
        %2113 = vmatpush1.bf16.msra.mxu0 0
        %2114 = vmatprep.subr.bf16.mxu0 0
        %2115 = vmatpush1.bf16.msra.mxu0 0
        %2116 = vmatprep.subr.bf16.mxu0 0
        %2117 = vmatpush1.bf16.msra.mxu0 0
        %2118 = vmatprep.subr.bf16.mxu0 0
        %2119 = vmatpush1.bf16.msra.mxu0 0
        %2120 = vmatprep.subr.bf16.mxu0 0
        %2121 = vmatpush1.bf16.msra.mxu0 0
        %2122 = vmatprep.subr.bf16.mxu0 0
        %2123 = vmatpush1.bf16.msra.mxu0 0
        %2124 = vmatprep.subr.bf16.mxu0 0
        %2125 = vmatpush1.bf16.msra.mxu0 0
        %2126 = vmatprep.subr.bf16.mxu0 0
        %2127 = vmatpush1.bf16.msra.mxu0 0
        %2128 = vmatprep.mubr.bf16.mxu0 0
        %2129 = vmatmul.mubr.bf16.gmra.mrb[0].mxu0 %v2044
        %v2130 = vpop.f32.mrb[0].mxu0
        %v2131 = vadd.f32 0.0, %v2130
        %v2132 = vpop.f32.mrb[0].mxu0
        %v2133 = vpop.f32.mrb[0].mxu0
        %v2134 = vpop.f32.mrb[0].mxu0
        %2135 = vdwg.mxu0
        %v2136 = vadd.f32 %v2026, %v2090
        %v2137 = vadd.f32 %v2027, %v2092
        %v2138 = vadd.f32 %v2028, %v2131
        %2139 = vrot.lane.b32.xlu0 %v1272, 109
        %v2140 = vpop.permute.xlu0 %2139
        %2141 = vrot.lane.b32.xlu0 %v1273, 109
        %v2142 = vpop.permute.xlu0 %2141
        %2143 = vrot.lane.b32.xlu0 %v1274, 109
        %v2144 = vpop.permute.xlu0 %2143
        %v2145 = vsel %vm1135, %v2142, %v2144
        %v2146 = vsel %vm1135, %v2140, %v2142
        %v2147 = vsel %vm1135, %v2144, %v2140
        %s2148 = scalar_lea.vmem %s2, 32
        %v2149 = vld [vmem:[%s2148] sm:$0xf]
        %v2150 = vpack.c.bf16 %v2146, %v2146
        %v2151 = vpack.c.bf16 %v2145, %v2145
        %v2152 = vpack.c.bf16 %v2147, %v2147
        %v2154 = vsel %vm285, %v2149, 0
        %v2157 = vsel %vm289, %v2150, 0
        %v2160 = vsel %vm289, %v2151, 0
        %v2163 = vsel %vm289, %v2152, 0
        %2165 = vmatprep.subr.bf16.mxu0 %v2160
        %2166 = vmatpush1.bf16.msra.mxu0 %v2157
        %2167 = vmatprep.subr.bf16.mxu0 0
        %2168 = vmatpush1.bf16.msra.mxu0 0
        %2169 = vmatprep.subr.bf16.mxu0 0
        %2170 = vmatpush1.bf16.msra.mxu0 0
        %2171 = vmatprep.subr.bf16.mxu0 0
        %2172 = vmatpush1.bf16.msra.mxu0 0
        %2173 = vmatprep.subr.bf16.mxu0 0
        %2174 = vmatpush1.bf16.msra.mxu0 0
        %2175 = vmatprep.subr.bf16.mxu0 0
        %2176 = vmatpush1.bf16.msra.mxu0 0
        %2177 = vmatprep.subr.bf16.mxu0 0
        %2178 = vmatpush1.bf16.msra.mxu0 0
        %2179 = vmatprep.subr.bf16.mxu0 0
        %2180 = vmatpush1.bf16.msra.mxu0 0
        %2181 = vmatprep.subr.bf16.mxu0 0
        %2182 = vmatpush1.bf16.msra.mxu0 0
        %2183 = vmatprep.subr.bf16.mxu0 0
        %2184 = vmatpush1.bf16.msra.mxu0 0
        %2185 = vmatprep.subr.bf16.mxu0 0
        %2186 = vmatpush1.bf16.msra.mxu0 0
        %2187 = vmatprep.subr.bf16.mxu0 0
        %2188 = vmatpush1.bf16.msra.mxu0 0
        %2189 = vmatprep.subr.bf16.mxu0 0
        %2190 = vmatpush1.bf16.msra.mxu0 0
        %2191 = vmatprep.subr.bf16.mxu0 0
        %2192 = vmatpush1.bf16.msra.mxu0 0
        %2193 = vmatprep.subr.bf16.mxu0 0
        %2194 = vmatpush1.bf16.msra.mxu0 0
        %2195 = vmatprep.subr.bf16.mxu0 0
        %2196 = vmatpush1.bf16.msra.mxu0 0
        %2197 = vmatprep.mubr.bf16.mxu0 0
        %2198 = vmatmul.mubr.bf16.gmra.mrb[0].mxu0 %v2154
        %v2199 = vpop.f32.mrb[0].mxu0
        %v2200 = vadd.f32 0.0, %v2199
        %v2201 = vpop.f32.mrb[0].mxu0
        %v2202 = vadd.f32 0.0, %v2201
        %v2203 = vpop.f32.mrb[0].mxu0
        %v2204 = vpop.f32.mrb[0].mxu0
        %2205 = vdwg.mxu0
        %2206 = vmatprep.subr.bf16.mxu0 0
        %2207 = vmatpush1.bf16.msra.mxu0 %v2163
        %2208 = vmatprep.subr.bf16.mxu0 0
        %2209 = vmatpush1.bf16.msra.mxu0 0
        %2210 = vmatprep.subr.bf16.mxu0 0
        %2211 = vmatpush1.bf16.msra.mxu0 0
        %2212 = vmatprep.subr.bf16.mxu0 0
        %2213 = vmatpush1.bf16.msra.mxu0 0
        %2214 = vmatprep.subr.bf16.mxu0 0
        %2215 = vmatpush1.bf16.msra.mxu0 0
        %2216 = vmatprep.subr.bf16.mxu0 0
        %2217 = vmatpush1.bf16.msra.mxu0 0
        %2218 = vmatprep.subr.bf16.mxu0 0
        %2219 = vmatpush1.bf16.msra.mxu0 0
        %2220 = vmatprep.subr.bf16.mxu0 0
        %2221 = vmatpush1.bf16.msra.mxu0 0
        %2222 = vmatprep.subr.bf16.mxu0 0
        %2223 = vmatpush1.bf16.msra.mxu0 0
        %2224 = vmatprep.subr.bf16.mxu0 0
        %2225 = vmatpush1.bf16.msra.mxu0 0
        %2226 = vmatprep.subr.bf16.mxu0 0
        %2227 = vmatpush1.bf16.msra.mxu0 0
        %2228 = vmatprep.subr.bf16.mxu0 0
        %2229 = vmatpush1.bf16.msra.mxu0 0
        %2230 = vmatprep.subr.bf16.mxu0 0
        %2231 = vmatpush1.bf16.msra.mxu0 0
        %2232 = vmatprep.subr.bf16.mxu0 0
        %2233 = vmatpush1.bf16.msra.mxu0 0
        %2234 = vmatprep.subr.bf16.mxu0 0
        %2235 = vmatpush1.bf16.msra.mxu0 0
        %2236 = vmatprep.subr.bf16.mxu0 0
        %2237 = vmatpush1.bf16.msra.mxu0 0
        %2238 = vmatprep.mubr.bf16.mxu0 0
        %2239 = vmatmul.mubr.bf16.gmra.mrb[0].mxu0 %v2154
        %v2240 = vpop.f32.mrb[0].mxu0
        %v2241 = vadd.f32 0.0, %v2240
        %v2242 = vpop.f32.mrb[0].mxu0
        %v2243 = vpop.f32.mrb[0].mxu0
        %v2244 = vpop.f32.mrb[0].mxu0
        %2245 = vdwg.mxu0
        %v2246 = vadd.f32 %v2136, %v2200
        %v2247 = vadd.f32 %v2137, %v2202
        %v2248 = vadd.f32 %v2138, %v2241
        %v2249 = vld [vmem:[%s4] sm:$0xff]
        %2251 = vset.pattern.permute.xlu0 0
        %2252 = vperm.xlu0 %2251, %v2249
        %v2253 = vpop.permute.xlu0 %2252
        %v2255 = vadd.f32 %v2246, %v2253
        %v2256 = vadd.f32 %v2247, %v2253
        %v2257 = vadd.f32 %v2248, %v2253
        %v2258 = vadd.f32 %v251, %v2255
        %v2259 = vadd.f32 %v252, %v2256
        %v2260 = vadd.f32 %v253, %v2257
        %v2261 = vmul.f32 %v2258, 0.2
        %v2262 = vmul.f32 %v2259, 0.2
        %v2263 = vmul.f32 %v2260, 0.2
        %v2264 = vmax.f32 %v2258, %v2261
        %v2265 = vmax.f32 %v2259, %v2262
        %v2266 = vmax.f32 %v2260, %v2263
        %2267 = vst [vmem:[%s244] sm:$0xff] %v2264
        %2268 = vst [vmem:[%s244 + $0x8] sm:$0xff] %v2265
        %2269 = vst [vmem:[%s244 + $0x10] sm:$0xff] %v2266
        %s2270 = sand.u32 %s159, 1
        %s2271 = scalar_lea.sflag [#allocation3], %s2270
        %s2272 = sand.u32 %s159, 1
        %s2273 = smul.addr %s2272, 24
        %s2274 = scalar_lea.vmem [#allocation2], %s2273
        // Predicated region
        $region45: #{tpu_custom_call.1} parent=43 // pred_check
          %p2275 = pneg %p169
        $region46: #{tpu_custom_call.1} parent=43 // pred_check_branch
          %2277 = sbr.rel (%p2275) target = $region48
        $region47: #{tpu_custom_call.1} parent=43 // pred_region
          %s2279 = ssub.s32 384, 384
          %2280 = vsyncadd %s2271, %s2279
          %s2281 = smul.addr %s20, 3
          %s2282 = smul.addr %s2281, 128
          %s2283 = scalar_lea.hbm %s6, %s2282
          %s2285 = sshll.u32 %s2274, 4
          %s2286 = int_to_ptr.vmem [resolvable:$true] %s2285
          %2288 = dma.vmem_to_hbm [thread:$0]  %s2286, 384, %s2283, %s2271
        $region48: #{tpu_custom_call.1} parent=43 // pred_fallthru
          _
      $region44: #{tpu_custom_call.1} parent=5 // pred_fallthru
        _
      %p2289 = scmp.le.s32.totalorder 2, %s15
      // Predicated region
      $region49: #{tpu_custom_call.1} parent=5 // pred_check
        %p2290 = pneg %p2289
      $region50: #{tpu_custom_call.1} parent=5 // pred_check_branch
        %2292 = sbr.rel (%p2290) target = $region52
      $region51: #{tpu_custom_call.1} parent=5 // pred_region
        %s2293 = ssub.s32 %s15, 2
        // Predicated region
        $region53: #{tpu_custom_call.1} parent=51 // pred_check
          %p2294 = pneg %p175
        $region54: #{tpu_custom_call.1} parent=51 // pred_check_branch
          %2296 = sbr.rel (%p2294) target = $region56
        $region55: #{tpu_custom_call.1} parent=51 // pred_region
          %s2297 = sand.u32 %s160, 1
          %s2298 = scalar_lea.sflag [#allocation3], %s2297
          %s2299 = sand.u32 %s160, 1
          %s2300 = smul.addr %s2299, 24
          %s2301 = scalar_lea.vmem [#allocation2], %s2300
          %2302 = dma.done %s2298, 384
        $region56: #{tpu_custom_call.1} parent=51 // pred_fallthru
          _
      $region52: #{tpu_custom_call.1} parent=5 // pred_fallthru
        _
    $region6: #{tpu_custom_call.1} parent=1 // loop_footer
      %s19 = sadd.s32 1, %s15
    $region7: #{tpu_custom_call.1} parent=1 // loop_footer_branch
      %14 = sbr.rel target = $region3
    $region8: #{tpu_custom_call.1} parent=1 // loop_exit
      _
    %2303 = vsyncpa [#allocation3], 1
    %s2304 = scalar_lea.sflag [#allocation3], 1
    %2305 = vsyncpa %s2304, 1

</llo_original>
